<compile_context>
chip_gen: v7x
topology: tpu7x:2x2x1
jax: 0.10.0
libtpu: 0.0.40
codegen_flags: <defaults>
</compile_context>

<pallas_src>
import functools

import jax
import jax.numpy as jnp
from jax import lax
from jax.experimental import pallas as pl
from jax.experimental.pallas import tpu as pltpu

VOCAB = 5396   # nn.Embedding(5396, 32)
EMB = 32       # embedding dim / Conv1d in-channels
COUT = 128     # Conv1d out-channels
KSIZE = 3      # Conv1d kernel size
LANES = 128    # lane-padded im2col width (K*EMB = 96 -> 128)


def tokencnn_kernel(x_ref, wc_ref, bc_ref, wf_ref, bf_ref, o_ref, *, l_conv):
    """One batch row: conv-as-matmul + bias + ReLU + global time-max + Linear(Cout->1).

    x_ref : (1, L, 128)  bf16  im2col'd, lane-padded activations for one batch row
    wc_ref: (128, Cout)  bf16  im2col conv weight, rows K*Cin..127 are zero
    bc_ref: (1, Cout)    f32   conv bias
    wf_ref: (1, Cout)    f32   fc weight (torch layout (out=1, in=Cout))
    bf_ref: (1, 1)       f32   fc bias
    o_ref : (1, 1, 1)    f32
    """
    # Single deep (L,128)x(128,Cout) bf16 MXU matmul per row, f32 accumulation.
    y = jnp.dot(x_ref[0], wc_ref[...], preferred_element_type=jnp.float32)   # (L, Cout)
    y = jnp.maximum(y + bc_ref[...], 0.0)                                    # bias + ReLU

    # MaxPool1d(l_conv, 1) -> global max over the first l_conv rows.  Only the last sublane
    # tile needs masking; post-ReLU values are >= 0 so 0 is a safe neutral element for max.
    L = y.shape[0]
    l_head = (l_conv // 8) * 8                                    # sublane-aligned head (1992)
    head_max = jnp.max(y[:l_head], axis=0, keepdims=True)         # (1, Cout)
    tail = y[l_head:]                                              # (L - l_head, Cout) = (8, Cout)
    t_idx = lax.broadcasted_iota(jnp.int32, (L - l_head, 1), 0)
    tail_max = jnp.max(jnp.where(t_idx < (l_conv - l_head), tail, 0.0),
                       axis=0, keepdims=True)
    pooled = jnp.maximum(head_max, tail_max)                       # (1, Cout)

    # Dropout(0.5) is identity at inference.  Linear(Cout -> 1).
    out = jnp.sum(pooled * wf_ref[...], axis=1, keepdims=True) + bf_ref[...]  # (1, 1)
    o_ref[...] = out.reshape(1, 1, 1)


@jax.jit
def token_cnn_forward(token_ids, emb_table, wc_pad, bc, wf, bf):
    B, L = token_ids.shape
    Cin = emb_table.shape[1]
    KCinP, Cout = wc_pad.shape
    l_conv = L - KSIZE + 1

    # Embedding gather + im2col + lane-pad to 128 stay in plain JAX glue: cheap, XLA-fused,
    # and the (B, L, 128) bf16 result is pipeline-hidden by the BlockSpec double-buffering.
    # TODO(synk): fusing the token gather into the kernel would need a manual DMA-gather pattern.
    x_emb = jnp.take(emb_table, token_ids, axis=0)                           # (B, L, Cin) bf16
    parts = [jnp.pad(x_emb[:, k:, :], ((0, 0), (0, k), (0, 0))) for k in range(KSIZE)]
    parts.append(jnp.zeros((B, L, KCinP - KSIZE * Cin), x_emb.dtype))        # lane pad 96 -> 128
    x_col = jnp.concatenate(parts, axis=-1)                                  # (B, L, 128) bf16

    cost = pl.CostEstimate(
        flops=2 * B * L * KCinP * Cout + 4 * B * L * Cout,
        transcendentals=0,
        bytes_accessed=x_col.size * 2 + wc_pad.size * 2
        + (bc.size + wf.size + bf.size + B) * 4,
    )

    out = pl.pallas_call(
        functools.partial(tokencnn_kernel, l_conv=l_conv),
        out_shape=jax.ShapeDtypeStruct((B, 1, 1), jnp.float32),
        grid=(B,),
        in_specs=[
            pl.BlockSpec((1, L, KCinP), lambda b: (b, 0, 0)),
            pl.BlockSpec((KCinP, Cout), lambda b: (0, 0)),
            pl.BlockSpec((1, Cout), lambda b: (0, 0)),
            pl.BlockSpec((1, Cout), lambda b: (0, 0)),
            pl.BlockSpec((1, 1), lambda b: (0, 0)),
        ],
        out_specs=pl.BlockSpec((1, 1, 1), lambda b: (b, 0, 0)),
        compiler_params=pltpu.CompilerParams(dimension_semantics=("parallel",)),
        cost_estimate=cost,
    )(x_col, wc_pad, bc, wf, bf)
    return out.reshape(B, 1)


if __name__ == "__main__":
    key = jax.random.PRNGKey(0)
    k_ids, k_emb, k_wc, k_bc, k_wf, k_bf = jax.random.split(key, 6)

    B, L = 2, 2000  # L=2000 -> valid conv length 1998 -> MaxPool1d(1998, 1) -> length 1

    token_ids = jax.random.randint(k_ids, (B, L), 0, VOCAB, dtype=jnp.int32)
    # Embedding table + conv weight in bf16 (native MXU path); small params stay f32.
    emb_table = (jax.random.normal(k_emb, (VOCAB, EMB), jnp.float32) * 0.1).astype(jnp.bfloat16)
    wc_torch = jax.random.normal(k_wc, (COUT, EMB, KSIZE), jnp.float32) * 0.1   # torch (Cout,Cin,K)
    # im2col layout: wc_flat[k*Cin + ci, co] = wc_torch[co, ci, k]; zero-pad rows 96:128.
    wc_flat = jnp.transpose(wc_torch, (2, 1, 0)).reshape(KSIZE * EMB, COUT)
    wc_pad = (jnp.zeros((LANES, COUT), jnp.float32)
              .at[: KSIZE * EMB].set(wc_flat).astype(jnp.bfloat16))
    bc = (jax.random.normal(k_bc, (COUT,), jnp.float32) * 0.1).reshape(1, COUT)
    wf = jax.random.normal(k_wf, (1, COUT), jnp.float32) * 0.1
    bf = (jax.random.normal(k_bf, (1,), jnp.float32) * 0.1).reshape(1, 1)

    out = jax.block_until_ready(token_cnn_forward(token_ids, emb_table, wc_pad, bc, wf, bf))

    # Pure-JAX reference using the same bf16-quantized parameters, f32 math.
    x_f32 = jnp.take(emb_table, token_ids, axis=0).astype(jnp.float32)               # (B, L, Cin)
    wc_f32 = jnp.transpose(wc_torch.astype(jnp.bfloat16).astype(jnp.float32), (2, 1, 0))  # (K,Cin,Cout)
    Lc = L - KSIZE + 1
    conv = bc[None] + sum(
        jnp.einsum("blc,co->blo", x_f32[:, k:k + Lc, :], wc_f32[k],
                   precision=lax.Precision.HIGHEST)
        for k in range(KSIZE)
    )
    ref = jnp.maximum(conv, 0.0).max(axis=1) @ wf.T + bf

    assert out.shape == (B, 1), out.shape
    assert jnp.allclose(out, ref, atol=1e-2, rtol=1e-2), (out, ref)
    print("KERNEL_OK")
</pallas_src>

<mosaic_0001>
module attributes {stable_mosaic.version = 11 : i64} {
  func.func @tokencnn_kernel(%arg0: i32, %arg1: memref<1x2000x128xbf16, #tpu.memory_space<vmem>>, %arg2: memref<128x128xbf16, #tpu.memory_space<vmem>>, %arg3: memref<1x128xf32, #tpu.memory_space<vmem>>, %arg4: memref<1x128xf32, #tpu.memory_space<vmem>>, %arg5: memref<1x1xf32, #tpu.memory_space<vmem>>, %arg6: memref<1x1x1xf32, #tpu.memory_space<vmem>>) attributes {dimension_semantics = [#tpu.dimension_semantics<parallel>], iteration_bounds = array<i64: 2>, scalar_prefetch = 0 : i64, scratch_operands = 0 : i64, tpu.core_type = #tpu.core_type<tc>, window_params = [{transform_indices = @transform_0, window_bounds = array<i64: 1, 2000, 128>}, {pipeline_mode = #tpu.pipeline_mode<synchronous>, transform_indices = @transform_1, window_bounds = array<i64: 128, 128>}, {pipeline_mode = #tpu.pipeline_mode<synchronous>, transform_indices = @transform_2, window_bounds = array<i64: 1, 128>}, {pipeline_mode = #tpu.pipeline_mode<synchronous>, transform_indices = @transform_3, window_bounds = array<i64: 1, 128>}, {pipeline_mode = #tpu.pipeline_mode<synchronous>, transform_indices = @transform_4, window_bounds = array<i64: 1, 1>}, {transform_indices = @transform_5, window_bounds = array<i64: 1, 1, 1>}]} {
    %c0 = arith.constant 0 : index
    %c0_0 = arith.constant 0 : index
    %c0_1 = arith.constant 0 : index
    %0 = vector.load %arg1[%c0, %c0_0, %c0_1] : memref<1x2000x128xbf16, #tpu.memory_space<vmem>>, vector<1x2000x128xbf16>
    %1 = vector.shape_cast %0 : vector<1x2000x128xbf16> to vector<2000x128xbf16>
    %c0_2 = arith.constant 0 : index
    %c0_3 = arith.constant 0 : index
    %2 = vector.load %arg2[%c0_2, %c0_3] : memref<128x128xbf16, #tpu.memory_space<vmem>>, vector<128x128xbf16>
    %cst = arith.constant dense<0.000000e+00> : vector<2000x128xf32>
    %3 = tpu.matmul %1, %2, %cst {dimension_numbers = #tpu.dot_dimension_numbers<[1], [0], [0], [1], [0, 0, 1, 1], [], []>} : vector<2000x128xbf16>, vector<128x128xbf16>, vector<2000x128xf32> -> vector<2000x128xf32>
    %c0_4 = arith.constant 0 : index
    %c0_5 = arith.constant 0 : index
    %4 = vector.load %arg3[%c0_4, %c0_5] : memref<1x128xf32, #tpu.memory_space<vmem>>, vector<1x128xf32>
    %5 = vector.broadcast %4 : vector<1x128xf32> to vector<2000x128xf32>
    %6 = arith.addf %3, %5 : vector<2000x128xf32>
    %cst_6 = arith.constant 0.000000e+00 : f32
    %7 = vector.broadcast %cst_6 : f32 to vector<2000x128xf32>
    %8 = arith.maximumf %6, %7 : vector<2000x128xf32>
    %9 = vector.extract_strided_slice %8 {offsets = [0, 0], sizes = [1992, 128], strides = [1, 1]} : vector<2000x128xf32> to vector<1992x128xf32>
    %cst_7 = arith.constant dense<0xFF800000> : vector<128xf32>
    %10 = vector.multi_reduction <maximumf>, %9, %cst_7 [0] : vector<1992x128xf32> to vector<128xf32>
    %11 = vector.shape_cast %10 : vector<128xf32> to vector<1x128xf32>
    %12 = vector.extract_strided_slice %8 {offsets = [1992, 0], sizes = [8, 128], strides = [1, 1]} : vector<2000x128xf32> to vector<8x128xf32>
    %13 = tpu.iota {dimensions = array<i32: 0>} : vector<8x1xi32>
    %c6_i32 = arith.constant 6 : i32
    %14 = vector.broadcast %c6_i32 : i32 to vector<8x1xi32>
    %15 = arith.cmpi slt, %13, %14 : vector<8x1xi32>
    %cst_8 = arith.constant 0.000000e+00 : f32
    %16 = vector.shape_cast %15 : vector<8x1xi1> to vector<8x1xi1>
    %17 = vector.broadcast %16 : vector<8x1xi1> to vector<8x128xi1>
    %18 = vector.broadcast %cst_8 : f32 to vector<8x128xf32>
    %19 = arith.select %17, %12, %18 : vector<8x128xi1>, vector<8x128xf32>
    %cst_9 = arith.constant dense<0xFF800000> : vector<128xf32>
    %20 = vector.multi_reduction <maximumf>, %19, %cst_9 [0] : vector<8x128xf32> to vector<128xf32>
    %21 = vector.shape_cast %20 : vector<128xf32> to vector<1x128xf32>
    %22 = arith.maximumf %11, %21 : vector<1x128xf32>
    %c0_10 = arith.constant 0 : index
    %c0_11 = arith.constant 0 : index
    %23 = vector.load %arg4[%c0_10, %c0_11] : memref<1x128xf32, #tpu.memory_space<vmem>>, vector<1x128xf32>
    %24 = arith.mulf %22, %23 : vector<1x128xf32>
    %cst_12 = arith.constant dense<0.000000e+00> : vector<1xf32>
    %25 = vector.multi_reduction <add>, %24, %cst_12 [1] : vector<1x128xf32> to vector<1xf32>
    %26 = vector.shape_cast %25 : vector<1xf32> to vector<1x1xf32>
    %c0_13 = arith.constant 0 : index
    %c0_14 = arith.constant 0 : index
    %27 = vector.load %arg5[%c0_13, %c0_14] : memref<1x1xf32, #tpu.memory_space<vmem>>, vector<1x1xf32>
    %28 = arith.addf %26, %27 : vector<1x1xf32>
    %29 = vector.shape_cast %28 : vector<1x1xf32> to vector<1x1x1xf32>
    %c0_15 = arith.constant 0 : index
    %c0_16 = arith.constant 0 : index
    %c0_17 = arith.constant 0 : index
    %30 = vector.load %arg6[%c0_15, %c0_16, %c0_17] : memref<1x1x1xf32, #tpu.memory_space<vmem>>, vector<1x1x1xf32>
    tpu.vector_store %arg6[%c0_15, %c0_16, %c0_17], %29 {strides = array<i32>} : memref<1x1x1xf32, #tpu.memory_space<vmem>>, vector<1x1x1xf32>,
    return
  }
  func.func @transform_0(%arg0: i32) -> (i32, i32, i32) {
    %c0_i32 = arith.constant 0 : i32
    %c0_i32_0 = arith.constant 0 : i32
    %c0_i32_1 = arith.constant 0 : i32
    return %arg0, %c0_i32, %c0_i32_0 : i32, i32, i32
  }
  func.func @transform_1(%arg0: i32) -> (i32, i32) {
    %c0_i32 = arith.constant 0 : i32
    %c0_i32_0 = arith.constant 0 : i32
    %c0_i32_1 = arith.constant 0 : i32
    return %c0_i32, %c0_i32_0 : i32, i32
  }
  func.func @transform_2(%arg0: i32) -> (i32, i32) {
    %c0_i32 = arith.constant 0 : i32
    %c0_i32_0 = arith.constant 0 : i32
    %c0_i32_1 = arith.constant 0 : i32
    return %c0_i32, %c0_i32_0 : i32, i32
  }
  func.func @transform_3(%arg0: i32) -> (i32, i32) {
    %c0_i32 = arith.constant 0 : i32
    %c0_i32_0 = arith.constant 0 : i32
    %c0_i32_1 = arith.constant 0 : i32
    return %c0_i32, %c0_i32_0 : i32, i32
  }
  func.func @transform_4(%arg0: i32) -> (i32, i32) {
    %c0_i32 = arith.constant 0 : i32
    %c0_i32_0 = arith.constant 0 : i32
    %c0_i32_1 = arith.constant 0 : i32
    return %c0_i32, %c0_i32_0 : i32, i32
  }
  func.func @transform_5(%arg0: i32) -> (i32, i32, i32) {
    %c0_i32 = arith.constant 0 : i32
    %c0_i32_0 = arith.constant 0 : i32
    %c0_i32_1 = arith.constant 0 : i32
    return %arg0, %c0_i32, %c0_i32_0 : i32, i32, i32
  }
}

</mosaic_0001>

<llo_original>
// kernel: token_cnn_forward.1
$region0: #{token_cnn_forward.1}
  #allocation0 [shape = 'u32[]', space=smem, size = 0x4, offset = 0x4, fixed_abs, tag = 'smem constant byte address 0x4 - core index']
  #allocation1 [shape = 'u32[144,128]{1,0:T(1,128)}', space=vmem, size = 0x12000, scoped, tag = 'internal scratch']
  #allocation2 [shape = 'f32[1,1]{1,0:T(1,128)S(1)}', space=vmem, size = 0x200, scoped, tag = 'scoped memory for token_cnn_forward.1']
  %s0 = inlined_call_operand.vmem [shape: bf16[2,2000,128], index: 0, kind: input, shape index: {}]
  %s1 = inlined_call_operand.vmem [shape: bf16[128,128], index: 1, kind: input, shape index: {}]
  %s2 = inlined_call_operand.vmem [shape: f32[1,128], index: 2, kind: input, shape index: {}]
  %s3 = inlined_call_operand.vmem [shape: f32[1,128], index: 3, kind: input, shape index: {}]
  %s4 = inlined_call_operand.<no memory space> [shape: f32[1,1], index: 4, kind: input, shape index: {}]
  %s5 = inlined_call_operand.vmem [shape: f32[2,1,1], index: 5, kind: output, shape index: {}]
  %s6 = sld [smem:[#allocation0]]
  $region53: #{token_cnn_forward.1} parent=0
    _
  %s8 = ssub.s32 1, %s6
  %s9 = scalar_select 0, %s8, %s6
  %v10 = vstv %s4
  %11 = vst [vmem:[#allocation2] sm:$0x1] %v10
  loop: start=0, step=1, limit=4
  $region2: #{token_cnn_forward.1} parent=0 // loop_pre_header
    _
  $region3: #{token_cnn_forward.1} parent=0 // loop_header
    %s13 = sphi 0, %s17
    %p14 = scmp.ge.s32.totalorder %s13, 4
    %s23 = sphi 0, %s25
    %s26 = sphi 0, %s23
    %s27 = sphi 0, %s26
    %s43 = sphi 0, %s27
    %s47 = sphi 0, %s47
    %s49 = sphi 0, %s47
    %s50 = sphi 0, %s49
    %s64 = sphi 0, %s50
    %s68 = sphi 0, %s68
    %s70 = sphi 0, %s68
    %s71 = sphi 0, %s70
    %s85 = sphi 0, %s71
    %s89 = sphi 0, %s89
    %s91 = sphi 0, %s89
    %s92 = sphi 0, %s91
    %s106 = sphi 0, %s92
    %s110 = sphi 0, %s110
    %s112 = sphi 0, %s110
    %s113 = sphi 0, %s112
    %s127 = sphi 0, %s113
    %s133 = sphi 0, %s135
    %s136 = sphi 0, %s133
    %s137 = sphi 0, %s136
    %s153 = sphi 0, %s137
  $region4: #{token_cnn_forward.1} parent=0 // loop_header_branch
    %16 = sbr.rel (%p14) target = $region8
  $region5: #{token_cnn_forward.1} parent=0 // loop_body
    %s18 = ssub.s32 %s13, 1
    %s19 = ssub.s32 %s13, 2
    %s20 = sadd.s32 %s13, 1
    %s21 = ssub.s32 %s13, %s20
    %p22 = scmp.eq.s32.totalorder %s21, 0
    %s24 = sadd.s32 %s23, 1
    %s25 = scalar_select %p22, %s23, %s24
    %p28 = pneg %p22
    %p29 = scmp.eq.s32.totalorder %s13, 1
    %p30 = por %p28, %p29
    %p31 = scmp.ne.s32.totalorder %s23, %s26
    %p32 = scmp.eq.s32.totalorder %s13, 0
    %p33 = por %p31, %p32
    %p34 = scmp.ne.s32.totalorder %s23, %s26
    %p35 = scmp.eq.s32.totalorder %s18, 1
    %p36 = por %p34, %p35
    %p37 = scmp.ne.s32.totalorder %s26, %s27
    %p38 = scmp.eq.s32.totalorder %s18, 0
    %p39 = por %p37, %p38
    %p40 = scmp.ne.s32.totalorder %s26, %s27
    %p41 = scmp.eq.s32.totalorder %s19, 1
    %p42 = por %p40, %p41
    %p44 = scmp.ne.s32.totalorder %s27, %s43
    %p45 = scmp.eq.s32.totalorder %s19, 0
    %p46 = por %p44, %p45
    %s48 = sadd.s32 %s47, 1
    %p51 = scmp.eq.s32.totalorder %s13, 1
    %p52 = scmp.ne.s32.totalorder %s47, %s49
    %p53 = scmp.eq.s32.totalorder %s13, 0
    %p54 = por %p52, %p53
    %p55 = scmp.ne.s32.totalorder %s47, %s49
    %p56 = scmp.eq.s32.totalorder %s18, 1
    %p57 = por %p55, %p56
    %p58 = scmp.ne.s32.totalorder %s49, %s50
    %p59 = scmp.eq.s32.totalorder %s18, 0
    %p60 = por %p58, %p59
    %p61 = scmp.ne.s32.totalorder %s49, %s50
    %p62 = scmp.eq.s32.totalorder %s19, 1
    %p63 = por %p61, %p62
    %p65 = scmp.ne.s32.totalorder %s50, %s64
    %p66 = scmp.eq.s32.totalorder %s19, 0
    %p67 = por %p65, %p66
    %s69 = sadd.s32 %s68, 1
    %p72 = scmp.eq.s32.totalorder %s13, 1
    %p73 = scmp.ne.s32.totalorder %s68, %s70
    %p74 = scmp.eq.s32.totalorder %s13, 0
    %p75 = por %p73, %p74
    %p76 = scmp.ne.s32.totalorder %s68, %s70
    %p77 = scmp.eq.s32.totalorder %s18, 1
    %p78 = por %p76, %p77
    %p79 = scmp.ne.s32.totalorder %s70, %s71
    %p80 = scmp.eq.s32.totalorder %s18, 0
    %p81 = por %p79, %p80
    %p82 = scmp.ne.s32.totalorder %s70, %s71
    %p83 = scmp.eq.s32.totalorder %s19, 1
    %p84 = por %p82, %p83
    %p86 = scmp.ne.s32.totalorder %s71, %s85
    %p87 = scmp.eq.s32.totalorder %s19, 0
    %p88 = por %p86, %p87
    %s90 = sadd.s32 %s89, 1
    %p93 = scmp.eq.s32.totalorder %s13, 1
    %p94 = scmp.ne.s32.totalorder %s89, %s91
    %p95 = scmp.eq.s32.totalorder %s13, 0
    %p96 = por %p94, %p95
    %p97 = scmp.ne.s32.totalorder %s89, %s91
    %p98 = scmp.eq.s32.totalorder %s18, 1
    %p99 = por %p97, %p98
    %p100 = scmp.ne.s32.totalorder %s91, %s92
    %p101 = scmp.eq.s32.totalorder %s18, 0
    %p102 = por %p100, %p101
    %p103 = scmp.ne.s32.totalorder %s91, %s92
    %p104 = scmp.eq.s32.totalorder %s19, 1
    %p105 = por %p103, %p104
    %p107 = scmp.ne.s32.totalorder %s92, %s106
    %p108 = scmp.eq.s32.totalorder %s19, 0
    %p109 = por %p107, %p108
    %s111 = sadd.s32 %s110, 1
    %p114 = scmp.eq.s32.totalorder %s13, 1
    %p115 = scmp.ne.s32.totalorder %s110, %s112
    %p116 = scmp.eq.s32.totalorder %s13, 0
    %p117 = por %p115, %p116
    %p118 = scmp.ne.s32.totalorder %s110, %s112
    %p119 = scmp.eq.s32.totalorder %s18, 1
    %p120 = por %p118, %p119
    %p121 = scmp.ne.s32.totalorder %s112, %s113
    %p122 = scmp.eq.s32.totalorder %s18, 0
    %p123 = por %p121, %p122
    %p124 = scmp.ne.s32.totalorder %s112, %s113
    %p125 = scmp.eq.s32.totalorder %s19, 1
    %p126 = por %p124, %p125
    %p128 = scmp.ne.s32.totalorder %s113, %s127
    %p129 = scmp.eq.s32.totalorder %s19, 0
    %p130 = por %p128, %p129
    %s131 = ssub.s32 %s13, %s20
    %p132 = scmp.eq.s32.totalorder %s131, 0
    %s134 = sadd.s32 %s133, 1
    %s135 = scalar_select %p132, %s133, %s134
    %p138 = pneg %p132
    %p139 = scmp.eq.s32.totalorder %s13, 1
    %p140 = por %p138, %p139
    %p141 = scmp.ne.s32.totalorder %s133, %s136
    %p142 = scmp.eq.s32.totalorder %s13, 0
    %p143 = por %p141, %p142
    %p144 = scmp.ne.s32.totalorder %s133, %s136
    %p145 = scmp.eq.s32.totalorder %s18, 1
    %p146 = por %p144, %p145
    %p147 = scmp.ne.s32.totalorder %s136, %s137
    %p148 = scmp.eq.s32.totalorder %s18, 0
    %p149 = por %p147, %p148
    %p150 = scmp.ne.s32.totalorder %s136, %s137
    %p151 = scmp.eq.s32.totalorder %s19, 1
    %p152 = por %p150, %p151
    %p154 = scmp.ne.s32.totalorder %s137, %s153
    %p155 = scmp.eq.s32.totalorder %s19, 0
    %p156 = por %p154, %p155
    %p157 = scmp.le.s32.totalorder 1, %s13
    %p158 = scmp.lt.s32.totalorder %s13, 3
    %p159 = pnand %p157, %p158
    %p160 = pneg %p159
    // Predicated region
    $region9: #{token_cnn_forward.1} parent=5 // pred_check
      _
    $region10: #{token_cnn_forward.1} parent=5 // pred_check_branch
      %162 = sbr.rel (%p159) target = $region12
    $region11: #{token_cnn_forward.1} parent=5 // pred_region
      %s163 = ssub.s32 %s13, 1
      // Predicated region
      $region13: #{token_cnn_forward.1} parent=11 // pred_check
        %p164 = pneg %p60
      $region14: #{token_cnn_forward.1} parent=11 // pred_check_branch
        %166 = sbr.rel (%p164) target = $region16
      $region15: #{token_cnn_forward.1} parent=11 // pred_region
        _
      $region16: #{token_cnn_forward.1} parent=11 // pred_fallthru
        _
      // Predicated region
      $region17: #{token_cnn_forward.1} parent=11 // pred_check
        %p167 = pneg %p81
      $region18: #{token_cnn_forward.1} parent=11 // pred_check_branch
        %169 = sbr.rel (%p167) target = $region20
      $region19: #{token_cnn_forward.1} parent=11 // pred_region
        _
      $region20: #{token_cnn_forward.1} parent=11 // pred_fallthru
        _
      // Predicated region
      $region21: #{token_cnn_forward.1} parent=11 // pred_check
        %p170 = pneg %p102
      $region22: #{token_cnn_forward.1} parent=11 // pred_check_branch
        %172 = sbr.rel (%p170) target = $region24
      $region23: #{token_cnn_forward.1} parent=11 // pred_region
        _
      $region24: #{token_cnn_forward.1} parent=11 // pred_fallthru
        _
      // Predicated region
      $region25: #{token_cnn_forward.1} parent=11 // pred_check
        %p173 = pneg %p123
      $region26: #{token_cnn_forward.1} parent=11 // pred_check_branch
        %175 = sbr.rel (%p173) target = $region28
      $region27: #{token_cnn_forward.1} parent=11 // pred_region
        _
      $region28: #{token_cnn_forward.1} parent=11 // pred_fallthru
        _
    $region12: #{token_cnn_forward.1} parent=5 // pred_fallthru
      _
    %p176 = scmp.lt.s32.totalorder %s13, 2
    // Predicated region
    $region29: #{token_cnn_forward.1} parent=5 // pred_check
      %p177 = pneg %p176
    $region30: #{token_cnn_forward.1} parent=5 // pred_check_branch
      %179 = sbr.rel (%p177) target = $region32
    $region31: #{token_cnn_forward.1} parent=5 // pred_region
      // Predicated region
      $region33: #{token_cnn_forward.1} parent=31 // pred_check
        %p180 = pneg %p33
      $region34: #{token_cnn_forward.1} parent=31 // pred_check_branch
        %182 = sbr.rel (%p180) target = $region36
      $region35: #{token_cnn_forward.1} parent=31 // pred_region
        %p183 = scmp.lt.s32.totalorder %s13, 1
        %s184 = scalar_select %p183, %s13, 1
        %s185 = smul.addr %s184, 250
        %s186 = smul.addr %s185, 4
        %s187 = scalar_lea.vmem %s0, %s186
      $region36: #{token_cnn_forward.1} parent=31 // pred_fallthru
        _
    $region32: #{token_cnn_forward.1} parent=5 // pred_fallthru
      _
    %p188 = scmp.le.s32.totalorder 1, %s13
    %p189 = scmp.lt.s32.totalorder %s13, 3
    %p190 = pnand %p188, %p189
    %p191 = pneg %p190
    // Predicated region
    $region37: #{token_cnn_forward.1} parent=5 // pred_check
      _
    $region38: #{token_cnn_forward.1} parent=5 // pred_check_branch
      %193 = sbr.rel (%p190) target = $region40
    $region39: #{token_cnn_forward.1} parent=5 // pred_region
      %s194 = ssub.s32 %s13, 1
      %p195 = scmp.lt.s32.totalorder %s18, 1
      %s196 = scalar_select %p195, %s18, 1
      %s197 = smul.addr %s196, 250
      %s198 = smul.addr %s197, 4
      %s199 = scalar_lea.vmem %s0, %s198
      %p200 = pneg %p39
      %p201 = pneg %p36
      %p202 = pneg %p60
      %p203 = pneg %p57
      %p204 = pneg %p81
      %p205 = pneg %p78
      %p206 = pneg %p102
      %p207 = pneg %p99
      %p208 = pneg %p123
      %p209 = pneg %p120
      %p210 = pneg %p149
      %p211 = pneg %p146
      %p212 = scmp.lt.s32.totalorder %s18, 1
      %s213 = scalar_select %p212, %s18, 1
      %s214 = scalar_lea.vmem %s5, %s213
      %p215 = scmp.lt.s32.totalorder %s18, 1
      %s216 = scalar_select %p215, %s18, 1
      %s217 = smul.addr %s216, 250
      %s218 = smul.addr %s217, 4
      %s219 = scalar_lea.vmem %s0, %s218
      %p220 = scmp.lt.s32.totalorder %s18, 1
      %s221 = scalar_select %p220, %s18, 1
      %s222 = scalar_lea.vmem %s5, %s221
      %v224 = vld [vmem:[%s219] sm:$0xf]
      %v225 = vld [vmem:[%s219 + $0x4] sm:$0xf]
      %v226 = vld [vmem:[%s219 + $0x8] sm:$0xf]
      %v227 = vld [vmem:[%s219 + $0xc] sm:$0xf]
      %v228 = vld [vmem:[%s219 + $0x10] sm:$0xf]
      %v229 = vld [vmem:[%s219 + $0x14] sm:$0xf]
      %v230 = vld [vmem:[%s219 + $0x18] sm:$0xf]
      %v231 = vld [vmem:[%s219 + $0x1c] sm:$0xf]
      %v232 = vld [vmem:[%s219 + $0x20] sm:$0xf]
      %v233 = vld [vmem:[%s219 + $0x24] sm:$0xf]
      %v234 = vld [vmem:[%s219 + $0x28] sm:$0xf]
      %v235 = vld [vmem:[%s219 + $0x2c] sm:$0xf]
      %v236 = vld [vmem:[%s219 + $0x30] sm:$0xf]
      %v237 = vld [vmem:[%s219 + $0x34] sm:$0xf]
      %v238 = vld [vmem:[%s219 + $0x38] sm:$0xf]
      %v239 = vld [vmem:[%s219 + $0x3c] sm:$0xf]
      %v240 = vld [vmem:[%s219 + $0x40] sm:$0xf]
      %v241 = vld [vmem:[%s219 + $0x44] sm:$0xf]
      %v242 = vld [vmem:[%s219 + $0x48] sm:$0xf]
      %v243 = vld [vmem:[%s219 + $0x4c] sm:$0xf]
      %v244 = vld [vmem:[%s219 + $0x50] sm:$0xf]
      %v245 = vld [vmem:[%s219 + $0x54] sm:$0xf]
      %v246 = vld [vmem:[%s219 + $0x58] sm:$0xf]
      %v247 = vld [vmem:[%s219 + $0x5c] sm:$0xf]
      %v248 = vld [vmem:[%s219 + $0x60] sm:$0xf]
      %v249 = vld [vmem:[%s219 + $0x64] sm:$0xf]
      %v250 = vld [vmem:[%s219 + $0x68] sm:$0xf]
      %v251 = vld [vmem:[%s219 + $0x6c] sm:$0xf]
      %v252 = vld [vmem:[%s219 + $0x70] sm:$0xf]
      %v253 = vld [vmem:[%s219 + $0x74] sm:$0xf]
      %v254 = vld [vmem:[%s219 + $0x78] sm:$0xf]
      %v255 = vld [vmem:[%s219 + $0x7c] sm:$0xf]
      %v256 = vld [vmem:[%s219 + $0x80] sm:$0xf]
      %v257 = vld [vmem:[%s219 + $0x84] sm:$0xf]
      %v258 = vld [vmem:[%s219 + $0x88] sm:$0xf]
      %v259 = vld [vmem:[%s219 + $0x8c] sm:$0xf]
      %v260 = vld [vmem:[%s219 + $0x90] sm:$0xf]
      %v261 = vld [vmem:[%s219 + $0x94] sm:$0xf]
      %v262 = vld [vmem:[%s219 + $0x98] sm:$0xf]
      %v263 = vld [vmem:[%s219 + $0x9c] sm:$0xf]
      %v264 = vld [vmem:[%s219 + $0xa0] sm:$0xf]
      %v265 = vld [vmem:[%s219 + $0xa4] sm:$0xf]
      %v266 = vld [vmem:[%s219 + $0xa8] sm:$0xf]
      %v267 = vld [vmem:[%s219 + $0xac] sm:$0xf]
      %v268 = vld [vmem:[%s219 + $0xb0] sm:$0xf]
      %v269 = vld [vmem:[%s219 + $0xb4] sm:$0xf]
      %v270 = vld [vmem:[%s219 + $0xb8] sm:$0xf]
      %v271 = vld [vmem:[%s219 + $0xbc] sm:$0xf]
      %v272 = vld [vmem:[%s219 + $0xc0] sm:$0xf]
      %v273 = vld [vmem:[%s219 + $0xc4] sm:$0xf]
      %v274 = vld [vmem:[%s219 + $0xc8] sm:$0xf]
      %v275 = vld [vmem:[%s219 + $0xcc] sm:$0xf]
      %v276 = vld [vmem:[%s219 + $0xd0] sm:$0xf]
      %v277 = vld [vmem:[%s219 + $0xd4] sm:$0xf]
      %v278 = vld [vmem:[%s219 + $0xd8] sm:$0xf]
      %v279 = vld [vmem:[%s219 + $0xdc] sm:$0xf]
      %v280 = vld [vmem:[%s219 + $0xe0] sm:$0xf]
      %v281 = vld [vmem:[%s219 + $0xe4] sm:$0xf]
      %v282 = vld [vmem:[%s219 + $0xe8] sm:$0xf]
      %v283 = vld [vmem:[%s219 + $0xec] sm:$0xf]
      %v284 = vld [vmem:[%s219 + $0xf0] sm:$0xf]
      %v285 = vld [vmem:[%s219 + $0xf4] sm:$0xf]
      %v286 = vld [vmem:[%s219 + $0xf8] sm:$0xf]
      %v287 = vld [vmem:[%s219 + $0xfc] sm:$0xf]
      %v288 = vld [vmem:[%s219 + $0x100] sm:$0xf]
      %v289 = vld [vmem:[%s219 + $0x104] sm:$0xf]
      %v290 = vld [vmem:[%s219 + $0x108] sm:$0xf]
      %v291 = vld [vmem:[%s219 + $0x10c] sm:$0xf]
      %v292 = vld [vmem:[%s219 + $0x110] sm:$0xf]
      %v293 = vld [vmem:[%s219 + $0x114] sm:$0xf]
      %v294 = vld [vmem:[%s219 + $0x118] sm:$0xf]
      %v295 = vld [vmem:[%s219 + $0x11c] sm:$0xf]
      %v296 = vld [vmem:[%s219 + $0x120] sm:$0xf]
      %v297 = vld [vmem:[%s219 + $0x124] sm:$0xf]
      %v298 = vld [vmem:[%s219 + $0x128] sm:$0xf]
      %v299 = vld [vmem:[%s219 + $0x12c] sm:$0xf]
      %v300 = vld [vmem:[%s219 + $0x130] sm:$0xf]
      %v301 = vld [vmem:[%s219 + $0x134] sm:$0xf]
      %v302 = vld [vmem:[%s219 + $0x138] sm:$0xf]
      %v303 = vld [vmem:[%s219 + $0x13c] sm:$0xf]
      %v304 = vld [vmem:[%s219 + $0x140] sm:$0xf]
      %v305 = vld [vmem:[%s219 + $0x144] sm:$0xf]
      %v306 = vld [vmem:[%s219 + $0x148] sm:$0xf]
      %v307 = vld [vmem:[%s219 + $0x14c] sm:$0xf]
      %v308 = vld [vmem:[%s219 + $0x150] sm:$0xf]
      %v309 = vld [vmem:[%s219 + $0x154] sm:$0xf]
      %v310 = vld [vmem:[%s219 + $0x158] sm:$0xf]
      %v311 = vld [vmem:[%s219 + $0x15c] sm:$0xf]
      %v312 = vld [vmem:[%s219 + $0x160] sm:$0xf]
      %v313 = vld [vmem:[%s219 + $0x164] sm:$0xf]
      %v314 = vld [vmem:[%s219 + $0x168] sm:$0xf]
      %v315 = vld [vmem:[%s219 + $0x16c] sm:$0xf]
      %v316 = vld [vmem:[%s219 + $0x170] sm:$0xf]
      %v317 = vld [vmem:[%s219 + $0x174] sm:$0xf]
      %v318 = vld [vmem:[%s219 + $0x178] sm:$0xf]
      %v319 = vld [vmem:[%s219 + $0x17c] sm:$0xf]
      %v320 = vld [vmem:[%s219 + $0x180] sm:$0xf]
      %v321 = vld [vmem:[%s219 + $0x184] sm:$0xf]
      %v322 = vld [vmem:[%s219 + $0x188] sm:$0xf]
      %v323 = vld [vmem:[%s219 + $0x18c] sm:$0xf]
      %v324 = vld [vmem:[%s219 + $0x190] sm:$0xf]
      %v325 = vld [vmem:[%s219 + $0x194] sm:$0xf]
      %v326 = vld [vmem:[%s219 + $0x198] sm:$0xf]
      %v327 = vld [vmem:[%s219 + $0x19c] sm:$0xf]
      %v328 = vld [vmem:[%s219 + $0x1a0] sm:$0xf]
      %v329 = vld [vmem:[%s219 + $0x1a4] sm:$0xf]
      %v330 = vld [vmem:[%s219 + $0x1a8] sm:$0xf]
      %v331 = vld [vmem:[%s219 + $0x1ac] sm:$0xf]
      %v332 = vld [vmem:[%s219 + $0x1b0] sm:$0xf]
      %v333 = vld [vmem:[%s219 + $0x1b4] sm:$0xf]
      %v334 = vld [vmem:[%s219 + $0x1b8] sm:$0xf]
      %v335 = vld [vmem:[%s219 + $0x1bc] sm:$0xf]
      %v336 = vld [vmem:[%s219 + $0x1c0] sm:$0xf]
      %v337 = vld [vmem:[%s219 + $0x1c4] sm:$0xf]
      %v338 = vld [vmem:[%s219 + $0x1c8] sm:$0xf]
      %v339 = vld [vmem:[%s219 + $0x1cc] sm:$0xf]
      %v340 = vld [vmem:[%s219 + $0x1d0] sm:$0xf]
      %v341 = vld [vmem:[%s219 + $0x1d4] sm:$0xf]
      %v342 = vld [vmem:[%s219 + $0x1d8] sm:$0xf]
      %v343 = vld [vmem:[%s219 + $0x1dc] sm:$0xf]
      %v344 = vld [vmem:[%s219 + $0x1e0] sm:$0xf]
      %v345 = vld [vmem:[%s219 + $0x1e4] sm:$0xf]
      %v346 = vld [vmem:[%s219 + $0x1e8] sm:$0xf]
      %v347 = vld [vmem:[%s219 + $0x1ec] sm:$0xf]
      %v348 = vld [vmem:[%s219 + $0x1f0] sm:$0xf]
      %v349 = vld [vmem:[%s219 + $0x1f4] sm:$0xf]
      %v350 = vld [vmem:[%s219 + $0x1f8] sm:$0xf]
      %v351 = vld [vmem:[%s219 + $0x1fc] sm:$0xf]
      %v352 = vld [vmem:[%s219 + $0x200] sm:$0xf]
      %v353 = vld [vmem:[%s219 + $0x204] sm:$0xf]
      %v354 = vld [vmem:[%s219 + $0x208] sm:$0xf]
      %v355 = vld [vmem:[%s219 + $0x20c] sm:$0xf]
      %v356 = vld [vmem:[%s219 + $0x210] sm:$0xf]
      %v357 = vld [vmem:[%s219 + $0x214] sm:$0xf]
      %v358 = vld [vmem:[%s219 + $0x218] sm:$0xf]
      %v359 = vld [vmem:[%s219 + $0x21c] sm:$0xf]
      %v360 = vld [vmem:[%s219 + $0x220] sm:$0xf]
      %v361 = vld [vmem:[%s219 + $0x224] sm:$0xf]
      %v362 = vld [vmem:[%s219 + $0x228] sm:$0xf]
      %v363 = vld [vmem:[%s219 + $0x22c] sm:$0xf]
      %v364 = vld [vmem:[%s219 + $0x230] sm:$0xf]
      %v365 = vld [vmem:[%s219 + $0x234] sm:$0xf]
      %v366 = vld [vmem:[%s219 + $0x238] sm:$0xf]
      %v367 = vld [vmem:[%s219 + $0x23c] sm:$0xf]
      %v368 = vld [vmem:[%s219 + $0x240] sm:$0xf]
      %v369 = vld [vmem:[%s219 + $0x244] sm:$0xf]
      %v370 = vld [vmem:[%s219 + $0x248] sm:$0xf]
      %v371 = vld [vmem:[%s219 + $0x24c] sm:$0xf]
      %v372 = vld [vmem:[%s219 + $0x250] sm:$0xf]
      %v373 = vld [vmem:[%s219 + $0x254] sm:$0xf]
      %v374 = vld [vmem:[%s219 + $0x258] sm:$0xf]
      %v375 = vld [vmem:[%s219 + $0x25c] sm:$0xf]
      %v376 = vld [vmem:[%s219 + $0x260] sm:$0xf]
      %v377 = vld [vmem:[%s219 + $0x264] sm:$0xf]
      %v378 = vld [vmem:[%s219 + $0x268] sm:$0xf]
      %v379 = vld [vmem:[%s219 + $0x26c] sm:$0xf]
      %v380 = vld [vmem:[%s219 + $0x270] sm:$0xf]
      %v381 = vld [vmem:[%s219 + $0x274] sm:$0xf]
      %v382 = vld [vmem:[%s219 + $0x278] sm:$0xf]
      %v383 = vld [vmem:[%s219 + $0x27c] sm:$0xf]
      %v384 = vld [vmem:[%s219 + $0x280] sm:$0xf]
      %v385 = vld [vmem:[%s219 + $0x284] sm:$0xf]
      %v386 = vld [vmem:[%s219 + $0x288] sm:$0xf]
      %v387 = vld [vmem:[%s219 + $0x28c] sm:$0xf]
      %v388 = vld [vmem:[%s219 + $0x290] sm:$0xf]
      %v389 = vld [vmem:[%s219 + $0x294] sm:$0xf]
      %v390 = vld [vmem:[%s219 + $0x298] sm:$0xf]
      %v391 = vld [vmem:[%s219 + $0x29c] sm:$0xf]
      %v392 = vld [vmem:[%s219 + $0x2a0] sm:$0xf]
      %v393 = vld [vmem:[%s219 + $0x2a4] sm:$0xf]
      %v394 = vld [vmem:[%s219 + $0x2a8] sm:$0xf]
      %v395 = vld [vmem:[%s219 + $0x2ac] sm:$0xf]
      %v396 = vld [vmem:[%s219 + $0x2b0] sm:$0xf]
      %v397 = vld [vmem:[%s219 + $0x2b4] sm:$0xf]
      %v398 = vld [vmem:[%s219 + $0x2b8] sm:$0xf]
      %v399 = vld [vmem:[%s219 + $0x2bc] sm:$0xf]
      %v400 = vld [vmem:[%s219 + $0x2c0] sm:$0xf]
      %v401 = vld [vmem:[%s219 + $0x2c4] sm:$0xf]
      %v402 = vld [vmem:[%s219 + $0x2c8] sm:$0xf]
      %v403 = vld [vmem:[%s219 + $0x2cc] sm:$0xf]
      %v404 = vld [vmem:[%s219 + $0x2d0] sm:$0xf]
      %v405 = vld [vmem:[%s219 + $0x2d4] sm:$0xf]
      %v406 = vld [vmem:[%s219 + $0x2d8] sm:$0xf]
      %v407 = vld [vmem:[%s219 + $0x2dc] sm:$0xf]
      %v408 = vld [vmem:[%s219 + $0x2e0] sm:$0xf]
      %v409 = vld [vmem:[%s219 + $0x2e4] sm:$0xf]
      %v410 = vld [vmem:[%s219 + $0x2e8] sm:$0xf]
      %v411 = vld [vmem:[%s219 + $0x2ec] sm:$0xf]
      %v412 = vld [vmem:[%s219 + $0x2f0] sm:$0xf]
      %v413 = vld [vmem:[%s219 + $0x2f4] sm:$0xf]
      %v414 = vld [vmem:[%s219 + $0x2f8] sm:$0xf]
      %v415 = vld [vmem:[%s219 + $0x2fc] sm:$0xf]
      %v416 = vld [vmem:[%s219 + $0x300] sm:$0xf]
      %v417 = vld [vmem:[%s219 + $0x304] sm:$0xf]
      %v418 = vld [vmem:[%s219 + $0x308] sm:$0xf]
      %v419 = vld [vmem:[%s219 + $0x30c] sm:$0xf]
      %v420 = vld [vmem:[%s219 + $0x310] sm:$0xf]
      %v421 = vld [vmem:[%s219 + $0x314] sm:$0xf]
      %v422 = vld [vmem:[%s219 + $0x318] sm:$0xf]
      %v423 = vld [vmem:[%s219 + $0x31c] sm:$0xf]
      %v424 = vld [vmem:[%s219 + $0x320] sm:$0xf]
      %v425 = vld [vmem:[%s219 + $0x324] sm:$0xf]
      %v426 = vld [vmem:[%s219 + $0x328] sm:$0xf]
      %v427 = vld [vmem:[%s219 + $0x32c] sm:$0xf]
      %v428 = vld [vmem:[%s219 + $0x330] sm:$0xf]
      %v429 = vld [vmem:[%s219 + $0x334] sm:$0xf]
      %v430 = vld [vmem:[%s219 + $0x338] sm:$0xf]
      %v431 = vld [vmem:[%s219 + $0x33c] sm:$0xf]
      %v432 = vld [vmem:[%s219 + $0x340] sm:$0xf]
      %v433 = vld [vmem:[%s219 + $0x344] sm:$0xf]
      %v434 = vld [vmem:[%s219 + $0x348] sm:$0xf]
      %v435 = vld [vmem:[%s219 + $0x34c] sm:$0xf]
      %v436 = vld [vmem:[%s219 + $0x350] sm:$0xf]
      %v437 = vld [vmem:[%s219 + $0x354] sm:$0xf]
      %v438 = vld [vmem:[%s219 + $0x358] sm:$0xf]
      %v439 = vld [vmem:[%s219 + $0x35c] sm:$0xf]
      %v440 = vld [vmem:[%s219 + $0x360] sm:$0xf]
      %v441 = vld [vmem:[%s219 + $0x364] sm:$0xf]
      %v442 = vld [vmem:[%s219 + $0x368] sm:$0xf]
      %v443 = vld [vmem:[%s219 + $0x36c] sm:$0xf]
      %v444 = vld [vmem:[%s219 + $0x370] sm:$0xf]
      %v445 = vld [vmem:[%s219 + $0x374] sm:$0xf]
      %v446 = vld [vmem:[%s219 + $0x378] sm:$0xf]
      %v447 = vld [vmem:[%s219 + $0x37c] sm:$0xf]
      %v448 = vld [vmem:[%s219 + $0x380] sm:$0xf]
      %v449 = vld [vmem:[%s219 + $0x384] sm:$0xf]
      %v450 = vld [vmem:[%s219 + $0x388] sm:$0xf]
      %v451 = vld [vmem:[%s219 + $0x38c] sm:$0xf]
      %v452 = vld [vmem:[%s219 + $0x390] sm:$0xf]
      %v453 = vld [vmem:[%s219 + $0x394] sm:$0xf]
      %v454 = vld [vmem:[%s219 + $0x398] sm:$0xf]
      %v455 = vld [vmem:[%s219 + $0x39c] sm:$0xf]
      %v456 = vld [vmem:[%s219 + $0x3a0] sm:$0xf]
      %v457 = vld [vmem:[%s219 + $0x3a4] sm:$0xf]
      %v458 = vld [vmem:[%s219 + $0x3a8] sm:$0xf]
      %v459 = vld [vmem:[%s219 + $0x3ac] sm:$0xf]
      %v460 = vld [vmem:[%s219 + $0x3b0] sm:$0xf]
      %v461 = vld [vmem:[%s219 + $0x3b4] sm:$0xf]
      %v462 = vld [vmem:[%s219 + $0x3b8] sm:$0xf]
      %v463 = vld [vmem:[%s219 + $0x3bc] sm:$0xf]
      %v464 = vld [vmem:[%s219 + $0x3c0] sm:$0xf]
      %v465 = vld [vmem:[%s219 + $0x3c4] sm:$0xf]
      %v466 = vld [vmem:[%s219 + $0x3c8] sm:$0xf]
      %v467 = vld [vmem:[%s219 + $0x3cc] sm:$0xf]
      %v468 = vld [vmem:[%s219 + $0x3d0] sm:$0xf]
      %v469 = vld [vmem:[%s219 + $0x3d4] sm:$0xf]
      %v470 = vld [vmem:[%s219 + $0x3d8] sm:$0xf]
      %v471 = vld [vmem:[%s219 + $0x3dc] sm:$0xf]
      %v472 = vld [vmem:[%s219 + $0x3e0] sm:$0xf]
      %v473 = vld [vmem:[%s219 + $0x3e4] sm:$0xf]
      %v474 = vld [vmem:[%s1] sm:$0xf]
      %v475 = vld [vmem:[%s1 + $0x4] sm:$0xf]
      %v476 = vld [vmem:[%s1 + $0x8] sm:$0xf]
      %v477 = vld [vmem:[%s1 + $0xc] sm:$0xf]
      %v478 = vld [vmem:[%s1 + $0x10] sm:$0xf]
      %v479 = vld [vmem:[%s1 + $0x14] sm:$0xf]
      %v480 = vld [vmem:[%s1 + $0x18] sm:$0xf]
      %v481 = vld [vmem:[%s1 + $0x1c] sm:$0xf]
      %v482 = vld [vmem:[%s1 + $0x20] sm:$0xf]
      %v483 = vld [vmem:[%s1 + $0x24] sm:$0xf]
      %v484 = vld [vmem:[%s1 + $0x28] sm:$0xf]
      %v485 = vld [vmem:[%s1 + $0x2c] sm:$0xf]
      %v486 = vld [vmem:[%s1 + $0x30] sm:$0xf]
      %v487 = vld [vmem:[%s1 + $0x34] sm:$0xf]
      %v488 = vld [vmem:[%s1 + $0x38] sm:$0xf]
      %v489 = vld [vmem:[%s1 + $0x3c] sm:$0xf]
      %v490 = vld [vmem:[%s2] sm:$0x1]
      %v492 = vlaneseq
      %v493 = vshrl.u32 %v492, 7
      %v494 = vsub.s32 0, %v493
      %v495 = vrot.slane %v490, %v494
      %v747 = vunpack.c.l.b16 %v224
      %v748 = vunpack.c.l.b16 %v225
      %v749 = vunpack.c.l.b16 %v226
      %v750 = vunpack.c.l.b16 %v227
      %v751 = vunpack.c.l.b16 %v228
      %v752 = vunpack.c.l.b16 %v229
      %v753 = vunpack.c.l.b16 %v230
      %v754 = vunpack.c.l.b16 %v231
      %v755 = vunpack.c.l.b16 %v232
      %v756 = vunpack.c.l.b16 %v233
      %v757 = vunpack.c.l.b16 %v234
      %v758 = vunpack.c.l.b16 %v235
      %v759 = vunpack.c.l.b16 %v236
      %v760 = vunpack.c.l.b16 %v237
      %v761 = vunpack.c.l.b16 %v238
      %v762 = vunpack.c.l.b16 %v239
      %v763 = vunpack.c.l.b16 %v240
      %v764 = vunpack.c.l.b16 %v241
      %v765 = vunpack.c.l.b16 %v242
      %v766 = vunpack.c.l.b16 %v243
      %v767 = vunpack.c.l.b16 %v244
      %v768 = vunpack.c.l.b16 %v245
      %v769 = vunpack.c.l.b16 %v246
      %v770 = vunpack.c.l.b16 %v247
      %v771 = vunpack.c.l.b16 %v248
      %v772 = vunpack.c.l.b16 %v249
      %v773 = vunpack.c.l.b16 %v250
      %v774 = vunpack.c.l.b16 %v251
      %v775 = vunpack.c.l.b16 %v252
      %v776 = vunpack.c.l.b16 %v253
      %v777 = vunpack.c.l.b16 %v254
      %v778 = vunpack.c.l.b16 %v255
      %v779 = vunpack.c.l.b16 %v256
      %v780 = vunpack.c.l.b16 %v257
      %v781 = vunpack.c.l.b16 %v258
      %v782 = vunpack.c.l.b16 %v259
      %v783 = vunpack.c.l.b16 %v260
      %v784 = vunpack.c.l.b16 %v261
      %v785 = vunpack.c.l.b16 %v262
      %v786 = vunpack.c.l.b16 %v263
      %v787 = vunpack.c.l.b16 %v264
      %v788 = vunpack.c.l.b16 %v265
      %v789 = vunpack.c.l.b16 %v266
      %v790 = vunpack.c.l.b16 %v267
      %v791 = vunpack.c.l.b16 %v268
      %v792 = vunpack.c.l.b16 %v269
      %v793 = vunpack.c.l.b16 %v270
      %v794 = vunpack.c.l.b16 %v271
      %v795 = vunpack.c.l.b16 %v272
      %v796 = vunpack.c.l.b16 %v273
      %v797 = vunpack.c.l.b16 %v274
      %v798 = vunpack.c.l.b16 %v275
      %v799 = vunpack.c.l.b16 %v276
      %v800 = vunpack.c.l.b16 %v277
      %v801 = vunpack.c.l.b16 %v278
      %v802 = vunpack.c.l.b16 %v279
      %v803 = vunpack.c.l.b16 %v280
      %v804 = vunpack.c.l.b16 %v281
      %v805 = vunpack.c.l.b16 %v282
      %v806 = vunpack.c.l.b16 %v283
      %v807 = vunpack.c.l.b16 %v284
      %v808 = vunpack.c.l.b16 %v285
      %v809 = vunpack.c.l.b16 %v286
      %v810 = vunpack.c.l.b16 %v287
      %v811 = vunpack.c.l.b16 %v288
      %v812 = vunpack.c.l.b16 %v289
      %v813 = vunpack.c.l.b16 %v290
      %v814 = vunpack.c.l.b16 %v291
      %v815 = vunpack.c.l.b16 %v292
      %v816 = vunpack.c.l.b16 %v293
      %v817 = vunpack.c.l.b16 %v294
      %v818 = vunpack.c.l.b16 %v295
      %v819 = vunpack.c.l.b16 %v296
      %v820 = vunpack.c.l.b16 %v297
      %v821 = vunpack.c.l.b16 %v298
      %v822 = vunpack.c.l.b16 %v299
      %v823 = vunpack.c.l.b16 %v300
      %v824 = vunpack.c.l.b16 %v301
      %v825 = vunpack.c.l.b16 %v302
      %v826 = vunpack.c.l.b16 %v303
      %v827 = vunpack.c.l.b16 %v304
      %v828 = vunpack.c.l.b16 %v305
      %v829 = vunpack.c.l.b16 %v306
      %v830 = vunpack.c.l.b16 %v307
      %v831 = vunpack.c.l.b16 %v308
      %v832 = vunpack.c.l.b16 %v309
      %v833 = vunpack.c.l.b16 %v310
      %v834 = vunpack.c.l.b16 %v311
      %v835 = vunpack.c.l.b16 %v312
      %v836 = vunpack.c.l.b16 %v313
      %v837 = vunpack.c.l.b16 %v314
      %v838 = vunpack.c.l.b16 %v315
      %v839 = vunpack.c.l.b16 %v316
      %v840 = vunpack.c.l.b16 %v317
      %v841 = vunpack.c.l.b16 %v318
      %v842 = vunpack.c.l.b16 %v319
      %v843 = vunpack.c.l.b16 %v320
      %v844 = vunpack.c.l.b16 %v321
      %v845 = vunpack.c.l.b16 %v322
      %v846 = vunpack.c.l.b16 %v323
      %v847 = vunpack.c.l.b16 %v324
      %v848 = vunpack.c.l.b16 %v325
      %v849 = vunpack.c.l.b16 %v326
      %v850 = vunpack.c.l.b16 %v327
      %v851 = vunpack.c.l.b16 %v328
      %v852 = vunpack.c.l.b16 %v329
      %v853 = vunpack.c.l.b16 %v330
      %v854 = vunpack.c.l.b16 %v331
      %v855 = vunpack.c.l.b16 %v332
      %v856 = vunpack.c.l.b16 %v333
      %v857 = vunpack.c.l.b16 %v334
      %v858 = vunpack.c.l.b16 %v335
      %v859 = vunpack.c.l.b16 %v336
      %v860 = vunpack.c.l.b16 %v337
      %v861 = vunpack.c.l.b16 %v338
      %v862 = vunpack.c.l.b16 %v339
      %v863 = vunpack.c.l.b16 %v340
      %v864 = vunpack.c.l.b16 %v341
      %v865 = vunpack.c.l.b16 %v342
      %v866 = vunpack.c.l.b16 %v343
      %v867 = vunpack.c.l.b16 %v344
      %v868 = vunpack.c.l.b16 %v345
      %v869 = vunpack.c.l.b16 %v346
      %v870 = vunpack.c.l.b16 %v347
      %v871 = vunpack.c.l.b16 %v348
      %v872 = vunpack.c.l.b16 %v349
      %v873 = vunpack.c.l.b16 %v350
      %v874 = vunpack.c.l.b16 %v351
      %v875 = vunpack.c.l.b16 %v352
      %v876 = vunpack.c.l.b16 %v353
      %v877 = vunpack.c.l.b16 %v354
      %v878 = vunpack.c.l.b16 %v355
      %v879 = vunpack.c.l.b16 %v356
      %v880 = vunpack.c.l.b16 %v357
      %v881 = vunpack.c.l.b16 %v358
      %v882 = vunpack.c.l.b16 %v359
      %v883 = vunpack.c.l.b16 %v360
      %v884 = vunpack.c.l.b16 %v361
      %v885 = vunpack.c.l.b16 %v362
      %v886 = vunpack.c.l.b16 %v363
      %v887 = vunpack.c.l.b16 %v364
      %v888 = vunpack.c.l.b16 %v365
      %v889 = vunpack.c.l.b16 %v366
      %v890 = vunpack.c.l.b16 %v367
      %v891 = vunpack.c.l.b16 %v368
      %v892 = vunpack.c.l.b16 %v369
      %v893 = vunpack.c.l.b16 %v370
      %v894 = vunpack.c.l.b16 %v371
      %v895 = vunpack.c.l.b16 %v372
      %v896 = vunpack.c.l.b16 %v373
      %v897 = vunpack.c.l.b16 %v374
      %v898 = vunpack.c.l.b16 %v375
      %v899 = vunpack.c.l.b16 %v376
      %v900 = vunpack.c.l.b16 %v377
      %v901 = vunpack.c.l.b16 %v378
      %v902 = vunpack.c.l.b16 %v379
      %v903 = vunpack.c.l.b16 %v380
      %v904 = vunpack.c.l.b16 %v381
      %v905 = vunpack.c.l.b16 %v382
      %v906 = vunpack.c.l.b16 %v383
      %v907 = vunpack.c.l.b16 %v384
      %v908 = vunpack.c.l.b16 %v385
      %v909 = vunpack.c.l.b16 %v386
      %v910 = vunpack.c.l.b16 %v387
      %v911 = vunpack.c.l.b16 %v388
      %v912 = vunpack.c.l.b16 %v389
      %v913 = vunpack.c.l.b16 %v390
      %v914 = vunpack.c.l.b16 %v391
      %v915 = vunpack.c.l.b16 %v392
      %v916 = vunpack.c.l.b16 %v393
      %v917 = vunpack.c.l.b16 %v394
      %v918 = vunpack.c.l.b16 %v395
      %v919 = vunpack.c.l.b16 %v396
      %v920 = vunpack.c.l.b16 %v397
      %v921 = vunpack.c.l.b16 %v398
      %v922 = vunpack.c.l.b16 %v399
      %v923 = vunpack.c.l.b16 %v400
      %v924 = vunpack.c.l.b16 %v401
      %v925 = vunpack.c.l.b16 %v402
      %v926 = vunpack.c.l.b16 %v403
      %v927 = vunpack.c.l.b16 %v404
      %v928 = vunpack.c.l.b16 %v405
      %v929 = vunpack.c.l.b16 %v406
      %v930 = vunpack.c.l.b16 %v407
      %v931 = vunpack.c.l.b16 %v408
      %v932 = vunpack.c.l.b16 %v409
      %v933 = vunpack.c.l.b16 %v410
      %v934 = vunpack.c.l.b16 %v411
      %v935 = vunpack.c.l.b16 %v412
      %v936 = vunpack.c.l.b16 %v413
      %v937 = vunpack.c.l.b16 %v414
      %v938 = vunpack.c.l.b16 %v415
      %v939 = vunpack.c.l.b16 %v416
      %v940 = vunpack.c.l.b16 %v417
      %v941 = vunpack.c.l.b16 %v418
      %v942 = vunpack.c.l.b16 %v419
      %v943 = vunpack.c.l.b16 %v420
      %v944 = vunpack.c.l.b16 %v421
      %v945 = vunpack.c.l.b16 %v422
      %v946 = vunpack.c.l.b16 %v423
      %v947 = vunpack.c.l.b16 %v424
      %v948 = vunpack.c.l.b16 %v425
      %v949 = vunpack.c.l.b16 %v426
      %v950 = vunpack.c.l.b16 %v427
      %v951 = vunpack.c.l.b16 %v428
      %v952 = vunpack.c.l.b16 %v429
      %v953 = vunpack.c.l.b16 %v430
      %v954 = vunpack.c.l.b16 %v431
      %v955 = vunpack.c.l.b16 %v432
      %v956 = vunpack.c.l.b16 %v433
      %v957 = vunpack.c.l.b16 %v434
      %v958 = vunpack.c.l.b16 %v435
      %v959 = vunpack.c.l.b16 %v436
      %v960 = vunpack.c.l.b16 %v437
      %v961 = vunpack.c.l.b16 %v438
      %v962 = vunpack.c.l.b16 %v439
      %v963 = vunpack.c.l.b16 %v440
      %v964 = vunpack.c.l.b16 %v441
      %v965 = vunpack.c.l.b16 %v442
      %v966 = vunpack.c.l.b16 %v443
      %v967 = vunpack.c.l.b16 %v444
      %v968 = vunpack.c.l.b16 %v445
      %v969 = vunpack.c.l.b16 %v446
      %v970 = vunpack.c.l.b16 %v447
      %v971 = vunpack.c.l.b16 %v448
      %v972 = vunpack.c.l.b16 %v449
      %v973 = vunpack.c.l.b16 %v450
      %v974 = vunpack.c.l.b16 %v451
      %v975 = vunpack.c.l.b16 %v452
      %v976 = vunpack.c.l.b16 %v453
      %v977 = vunpack.c.l.b16 %v454
      %v978 = vunpack.c.l.b16 %v455
      %v979 = vunpack.c.l.b16 %v456
      %v980 = vunpack.c.l.b16 %v457
      %v981 = vunpack.c.l.b16 %v458
      %v982 = vunpack.c.l.b16 %v459
      %v983 = vunpack.c.l.b16 %v460
      %v984 = vunpack.c.l.b16 %v461
      %v985 = vunpack.c.l.b16 %v462
      %v986 = vunpack.c.l.b16 %v463
      %v987 = vunpack.c.l.b16 %v464
      %v988 = vunpack.c.l.b16 %v465
      %v989 = vunpack.c.l.b16 %v466
      %v990 = vunpack.c.l.b16 %v467
      %v991 = vunpack.c.l.b16 %v468
      %v992 = vunpack.c.l.b16 %v469
      %v993 = vunpack.c.l.b16 %v470
      %v994 = vunpack.c.l.b16 %v471
      %v995 = vunpack.c.l.b16 %v472
      %v996 = vunpack.c.l.b16 %v473
      %v997 = vpack.c.b16 %v748, %v747
      %v998 = vpack.c.b16 %v750, %v749
      %v999 = vpack.c.b16 %v752, %v751
      %v1000 = vpack.c.b16 %v754, %v753
      %v1001 = vpack.c.b16 %v756, %v755
      %v1002 = vpack.c.b16 %v758, %v757
      %v1003 = vpack.c.b16 %v760, %v759
      %v1004 = vpack.c.b16 %v762, %v761
      %v1005 = vpack.c.b16 %v764, %v763
      %v1006 = vpack.c.b16 %v766, %v765
      %v1007 = vpack.c.b16 %v768, %v767
      %v1008 = vpack.c.b16 %v770, %v769
      %v1009 = vpack.c.b16 %v772, %v771
      %v1010 = vpack.c.b16 %v774, %v773
      %v1011 = vpack.c.b16 %v776, %v775
      %v1012 = vpack.c.b16 %v778, %v777
      %v1013 = vpack.c.b16 %v780, %v779
      %v1014 = vpack.c.b16 %v782, %v781
      %v1015 = vpack.c.b16 %v784, %v783
      %v1016 = vpack.c.b16 %v786, %v785
      %v1017 = vpack.c.b16 %v788, %v787
      %v1018 = vpack.c.b16 %v790, %v789
      %v1019 = vpack.c.b16 %v792, %v791
      %v1020 = vpack.c.b16 %v794, %v793
      %v1021 = vpack.c.b16 %v796, %v795
      %v1022 = vpack.c.b16 %v798, %v797
      %v1023 = vpack.c.b16 %v800, %v799
      %v1024 = vpack.c.b16 %v802, %v801
      %v1025 = vpack.c.b16 %v804, %v803
      %v1026 = vpack.c.b16 %v806, %v805
      %v1027 = vpack.c.b16 %v808, %v807
      %v1028 = vpack.c.b16 %v810, %v809
      %v1029 = vpack.c.b16 %v812, %v811
      %v1030 = vpack.c.b16 %v814, %v813
      %v1031 = vpack.c.b16 %v816, %v815
      %v1032 = vpack.c.b16 %v818, %v817
      %v1033 = vpack.c.b16 %v820, %v819
      %v1034 = vpack.c.b16 %v822, %v821
      %v1035 = vpack.c.b16 %v824, %v823
      %v1036 = vpack.c.b16 %v826, %v825
      %v1037 = vpack.c.b16 %v828, %v827
      %v1038 = vpack.c.b16 %v830, %v829
      %v1039 = vpack.c.b16 %v832, %v831
      %v1040 = vpack.c.b16 %v834, %v833
      %v1041 = vpack.c.b16 %v836, %v835
      %v1042 = vpack.c.b16 %v838, %v837
      %v1043 = vpack.c.b16 %v840, %v839
      %v1044 = vpack.c.b16 %v842, %v841
      %v1045 = vpack.c.b16 %v844, %v843
      %v1046 = vpack.c.b16 %v846, %v845
      %v1047 = vpack.c.b16 %v848, %v847
      %v1048 = vpack.c.b16 %v850, %v849
      %v1049 = vpack.c.b16 %v852, %v851
      %v1050 = vpack.c.b16 %v854, %v853
      %v1051 = vpack.c.b16 %v856, %v855
      %v1052 = vpack.c.b16 %v858, %v857
      %v1053 = vpack.c.b16 %v860, %v859
      %v1054 = vpack.c.b16 %v862, %v861
      %v1055 = vpack.c.b16 %v864, %v863
      %v1056 = vpack.c.b16 %v866, %v865
      %v1057 = vpack.c.b16 %v868, %v867
      %v1058 = vpack.c.b16 %v870, %v869
      %v1059 = vpack.c.b16 %v872, %v871
      %v1060 = vpack.c.b16 %v874, %v873
      %v1061 = vpack.c.b16 %v876, %v875
      %v1062 = vpack.c.b16 %v878, %v877
      %v1063 = vpack.c.b16 %v880, %v879
      %v1064 = vpack.c.b16 %v882, %v881
      %v1065 = vpack.c.b16 %v884, %v883
      %v1066 = vpack.c.b16 %v886, %v885
      %v1067 = vpack.c.b16 %v888, %v887
      %v1068 = vpack.c.b16 %v890, %v889
      %v1069 = vpack.c.b16 %v892, %v891
      %v1070 = vpack.c.b16 %v894, %v893
      %v1071 = vpack.c.b16 %v896, %v895
      %v1072 = vpack.c.b16 %v898, %v897
      %v1073 = vpack.c.b16 %v900, %v899
      %v1074 = vpack.c.b16 %v902, %v901
      %v1075 = vpack.c.b16 %v904, %v903
      %v1076 = vpack.c.b16 %v906, %v905
      %v1077 = vpack.c.b16 %v908, %v907
      %v1078 = vpack.c.b16 %v910, %v909
      %v1079 = vpack.c.b16 %v912, %v911
      %v1080 = vpack.c.b16 %v914, %v913
      %v1081 = vpack.c.b16 %v916, %v915
      %v1082 = vpack.c.b16 %v918, %v917
      %v1083 = vpack.c.b16 %v920, %v919
      %v1084 = vpack.c.b16 %v922, %v921
      %v1085 = vpack.c.b16 %v924, %v923
      %v1086 = vpack.c.b16 %v926, %v925
      %v1087 = vpack.c.b16 %v928, %v927
      %v1088 = vpack.c.b16 %v930, %v929
      %v1089 = vpack.c.b16 %v932, %v931
      %v1090 = vpack.c.b16 %v934, %v933
      %v1091 = vpack.c.b16 %v936, %v935
      %v1092 = vpack.c.b16 %v938, %v937
      %v1093 = vpack.c.b16 %v940, %v939
      %v1094 = vpack.c.b16 %v942, %v941
      %v1095 = vpack.c.b16 %v944, %v943
      %v1096 = vpack.c.b16 %v946, %v945
      %v1097 = vpack.c.b16 %v948, %v947
      %v1098 = vpack.c.b16 %v950, %v949
      %v1099 = vpack.c.b16 %v952, %v951
      %v1100 = vpack.c.b16 %v954, %v953
      %v1101 = vpack.c.b16 %v956, %v955
      %v1102 = vpack.c.b16 %v958, %v957
      %v1103 = vpack.c.b16 %v960, %v959
      %v1104 = vpack.c.b16 %v962, %v961
      %v1105 = vpack.c.b16 %v964, %v963
      %v1106 = vpack.c.b16 %v966, %v965
      %v1107 = vpack.c.b16 %v968, %v967
      %v1108 = vpack.c.b16 %v970, %v969
      %v1109 = vpack.c.b16 %v972, %v971
      %v1110 = vpack.c.b16 %v974, %v973
      %v1111 = vpack.c.b16 %v976, %v975
      %v1112 = vpack.c.b16 %v978, %v977
      %v1113 = vpack.c.b16 %v980, %v979
      %v1114 = vpack.c.b16 %v982, %v981
      %v1115 = vpack.c.b16 %v984, %v983
      %v1116 = vpack.c.b16 %v986, %v985
      %v1117 = vpack.c.b16 %v988, %v987
      %v1118 = vpack.c.b16 %v990, %v989
      %v1119 = vpack.c.b16 %v992, %v991
      %v1120 = vpack.c.b16 %v994, %v993
      %v1121 = vpack.c.b16 %v996, %v995
      %v1263 = vunpack.c.l.b16 %v474
      %v1264 = vunpack.c.l.b16 %v475
      %v1265 = vunpack.c.l.b16 %v476
      %v1266 = vunpack.c.l.b16 %v477
      %v1267 = vunpack.c.l.b16 %v478
      %v1268 = vunpack.c.l.b16 %v479
      %v1269 = vunpack.c.l.b16 %v480
      %v1270 = vunpack.c.l.b16 %v481
      %v1271 = vunpack.c.l.b16 %v482
      %v1272 = vunpack.c.l.b16 %v483
      %v1273 = vunpack.c.l.b16 %v484
      %v1274 = vunpack.c.l.b16 %v485
      %v1275 = vunpack.c.l.b16 %v486
      %v1276 = vunpack.c.l.b16 %v487
      %v1277 = vunpack.c.l.b16 %v488
      %v1278 = vunpack.c.l.b16 %v489
      %v1279 = vpack.c.b16 %v1264, %v1263
      %v1280 = vpack.c.b16 %v1266, %v1265
      %v1281 = vpack.c.b16 %v1268, %v1267
      %v1282 = vpack.c.b16 %v1270, %v1269
      %v1283 = vpack.c.b16 %v1272, %v1271
      %v1284 = vpack.c.b16 %v1274, %v1273
      %v1285 = vpack.c.b16 %v1276, %v1275
      %v1286 = vpack.c.b16 %v1278, %v1277
      %1295 = vmatprep.subr.bf16.mxu0 0
      %1296 = vmatpush1.bf16.msra.mxu0 %v1279
      %1297 = vmatprep.subr.bf16.mxu0 0
      %1298 = vmatpush1.bf16.msra.mxu0 %v1280
      %1299 = vmatprep.subr.bf16.mxu0 0
      %1300 = vmatpush1.bf16.msra.mxu0 %v1281
      %1301 = vmatprep.subr.bf16.mxu0 0
      %1302 = vmatpush1.bf16.msra.mxu0 %v1282
      %1303 = vmatprep.subr.bf16.mxu0 0
      %1304 = vmatpush1.bf16.msra.mxu0 %v1283
      %1305 = vmatprep.subr.bf16.mxu0 0
      %1306 = vmatpush1.bf16.msra.mxu0 %v1284
      %1307 = vmatprep.subr.bf16.mxu0 0
      %1308 = vmatpush1.bf16.msra.mxu0 %v1285
      %1309 = vmatprep.subr.bf16.mxu0 0
      %1310 = vmatpush1.bf16.msra.mxu0 %v1286
      %1311 = vmatprep.subr.bf16.mxu0 0
      %1312 = vmatpush1.bf16.msra.mxu0 0
      %1313 = vmatprep.subr.bf16.mxu0 0
      %1314 = vmatpush1.bf16.msra.mxu0 0
      %1315 = vmatprep.subr.bf16.mxu0 0
      %1316 = vmatpush1.bf16.msra.mxu0 0
      %1317 = vmatprep.subr.bf16.mxu0 0
      %1318 = vmatpush1.bf16.msra.mxu0 0
      %1319 = vmatprep.subr.bf16.mxu0 0
      %1320 = vmatpush1.bf16.msra.mxu0 0
      %1321 = vmatprep.subr.bf16.mxu0 0
      %1322 = vmatpush1.bf16.msra.mxu0 0
      %1323 = vmatprep.subr.bf16.mxu0 0
      %1324 = vmatpush1.bf16.msra.mxu0 0
      %1325 = vmatprep.subr.bf16.mxu0 0
      %1326 = vmatpush1.bf16.msra.mxu0 0
      %1327 = vmatprep.mubr.bf16.mxu0 0
      %1328 = vmatmul.mubr.bf16.gmra.mrb[0].mxu0 %v997
      %v1329 = vpop.f32.mrb[0].mxu0
      %v1330 = vadd.f32 %v495, %v1329
      %v1331 = vpop.f32.mrb[0].mxu0
      %v1332 = vpop.f32.mrb[0].mxu0
      %v1333 = vadd.f32 %v495, %v1332
      %v1334 = vpop.f32.mrb[0].mxu0
      %1335 = vmatprep.mubr.bf16.mxu0 0
      %1336 = vmatmul.mubr.bf16.gmra.mrb[0].mxu0 %v998
      %v1337 = vpop.f32.mrb[0].mxu0
      %v1338 = vadd.f32 %v495, %v1337
      %v1339 = vpop.f32.mrb[0].mxu0
      %v1340 = vpop.f32.mrb[0].mxu0
      %v1341 = vadd.f32 %v495, %v1340
      %v1342 = vpop.f32.mrb[0].mxu0
      %1343 = vmatprep.mubr.bf16.mxu0 0
      %1344 = vmatmul.mubr.bf16.gmra.mrb[0].mxu0 %v999
      %v1345 = vpop.f32.mrb[0].mxu0
      %v1346 = vadd.f32 %v495, %v1345
      %v1347 = vpop.f32.mrb[0].mxu0
      %v1348 = vpop.f32.mrb[0].mxu0
      %v1349 = vadd.f32 %v495, %v1348
      %v1350 = vpop.f32.mrb[0].mxu0
      %1351 = vmatprep.mubr.bf16.mxu0 0
      %1352 = vmatmul.mubr.bf16.gmra.mrb[0].mxu0 %v1000
      %v1353 = vpop.f32.mrb[0].mxu0
      %v1354 = vadd.f32 %v495, %v1353
      %v1355 = vpop.f32.mrb[0].mxu0
      %v1356 = vpop.f32.mrb[0].mxu0
      %v1357 = vadd.f32 %v495, %v1356
      %v1358 = vpop.f32.mrb[0].mxu0
      %1359 = vmatprep.mubr.bf16.mxu0 0
      %1360 = vmatmul.mubr.bf16.gmra.mrb[0].mxu0 %v1001
      %v1361 = vpop.f32.mrb[0].mxu0
      %v1362 = vadd.f32 %v495, %v1361
      %v1363 = vpop.f32.mrb[0].mxu0
      %v1364 = vpop.f32.mrb[0].mxu0
      %v1365 = vadd.f32 %v495, %v1364
      %v1366 = vpop.f32.mrb[0].mxu0
      %1367 = vmatprep.mubr.bf16.mxu0 0
      %1368 = vmatmul.mubr.bf16.gmra.mrb[0].mxu0 %v1002
      %v1369 = vpop.f32.mrb[0].mxu0
      %v1370 = vadd.f32 %v495, %v1369
      %v1371 = vpop.f32.mrb[0].mxu0
      %v1372 = vpop.f32.mrb[0].mxu0
      %v1373 = vadd.f32 %v495, %v1372
      %v1374 = vpop.f32.mrb[0].mxu0
      %1375 = vmatprep.mubr.bf16.mxu0 0
      %1376 = vmatmul.mubr.bf16.gmra.mrb[0].mxu0 %v1003
      %v1377 = vpop.f32.mrb[0].mxu0
      %v1378 = vadd.f32 %v495, %v1377
      %v1379 = vpop.f32.mrb[0].mxu0
      %v1380 = vpop.f32.mrb[0].mxu0
      %v1381 = vadd.f32 %v495, %v1380
      %v1382 = vpop.f32.mrb[0].mxu0
      %1383 = vmatprep.mubr.bf16.mxu0 0
      %1384 = vmatmul.mubr.bf16.gmra.mrb[0].mxu0 %v1004
      %v1385 = vpop.f32.mrb[0].mxu0
      %v1386 = vadd.f32 %v495, %v1385
      %v1387 = vpop.f32.mrb[0].mxu0
      %v1388 = vpop.f32.mrb[0].mxu0
      %v1389 = vadd.f32 %v495, %v1388
      %v1390 = vpop.f32.mrb[0].mxu0
      %1391 = vmatprep.mubr.bf16.mxu0 0
      %1392 = vmatmul.mubr.bf16.gmra.mrb[0].mxu0 %v1005
      %v1393 = vpop.f32.mrb[0].mxu0
      %v1394 = vadd.f32 %v495, %v1393
      %v1395 = vpop.f32.mrb[0].mxu0
      %v1396 = vpop.f32.mrb[0].mxu0
      %v1397 = vadd.f32 %v495, %v1396
      %v1398 = vpop.f32.mrb[0].mxu0
      %1399 = vmatprep.mubr.bf16.mxu0 0
      %1400 = vmatmul.mubr.bf16.gmra.mrb[0].mxu0 %v1006
      %v1401 = vpop.f32.mrb[0].mxu0
      %v1402 = vadd.f32 %v495, %v1401
      %v1403 = vpop.f32.mrb[0].mxu0
      %v1404 = vpop.f32.mrb[0].mxu0
      %v1405 = vadd.f32 %v495, %v1404
      %v1406 = vpop.f32.mrb[0].mxu0
      %1407 = vmatprep.mubr.bf16.mxu0 0
      %1408 = vmatmul.mubr.bf16.gmra.mrb[0].mxu0 %v1007
      %v1409 = vpop.f32.mrb[0].mxu0
      %v1410 = vadd.f32 %v495, %v1409
      %v1411 = vpop.f32.mrb[0].mxu0
      %v1412 = vpop.f32.mrb[0].mxu0
      %v1413 = vadd.f32 %v495, %v1412
      %v1414 = vpop.f32.mrb[0].mxu0
      %1415 = vmatprep.mubr.bf16.mxu0 0
      %1416 = vmatmul.mubr.bf16.gmra.mrb[0].mxu0 %v1008
      %v1417 = vpop.f32.mrb[0].mxu0
      %v1418 = vadd.f32 %v495, %v1417
      %v1419 = vpop.f32.mrb[0].mxu0
      %v1420 = vpop.f32.mrb[0].mxu0
      %v1421 = vadd.f32 %v495, %v1420
      %v1422 = vpop.f32.mrb[0].mxu0
      %1423 = vmatprep.mubr.bf16.mxu0 0
      %1424 = vmatmul.mubr.bf16.gmra.mrb[0].mxu0 %v1009
      %v1425 = vpop.f32.mrb[0].mxu0
      %v1426 = vadd.f32 %v495, %v1425
      %v1427 = vpop.f32.mrb[0].mxu0
      %v1428 = vpop.f32.mrb[0].mxu0
      %v1429 = vadd.f32 %v495, %v1428
      %v1430 = vpop.f32.mrb[0].mxu0
      %1431 = vmatprep.mubr.bf16.mxu0 0
      %1432 = vmatmul.mubr.bf16.gmra.mrb[0].mxu0 %v1010
      %v1433 = vpop.f32.mrb[0].mxu0
      %v1434 = vadd.f32 %v495, %v1433
      %v1435 = vpop.f32.mrb[0].mxu0
      %v1436 = vpop.f32.mrb[0].mxu0
      %v1437 = vadd.f32 %v495, %v1436
      %v1438 = vpop.f32.mrb[0].mxu0
      %1439 = vmatprep.mubr.bf16.mxu0 0
      %1440 = vmatmul.mubr.bf16.gmra.mrb[0].mxu0 %v1011
      %v1441 = vpop.f32.mrb[0].mxu0
      %v1442 = vadd.f32 %v495, %v1441
      %v1443 = vpop.f32.mrb[0].mxu0
      %v1444 = vpop.f32.mrb[0].mxu0
      %v1445 = vadd.f32 %v495, %v1444
      %v1446 = vpop.f32.mrb[0].mxu0
      %1447 = vmatprep.mubr.bf16.mxu0 0
      %1448 = vmatmul.mubr.bf16.gmra.mrb[0].mxu0 %v1012
      %v1449 = vpop.f32.mrb[0].mxu0
      %v1450 = vadd.f32 %v495, %v1449
      %v1451 = vpop.f32.mrb[0].mxu0
      %v1452 = vpop.f32.mrb[0].mxu0
      %v1453 = vadd.f32 %v495, %v1452
      %v1454 = vpop.f32.mrb[0].mxu0
      %1455 = vmatprep.mubr.bf16.mxu0 0
      %1456 = vmatmul.mubr.bf16.gmra.mrb[0].mxu0 %v1013
      %v1457 = vpop.f32.mrb[0].mxu0
      %v1458 = vadd.f32 %v495, %v1457
      %v1459 = vpop.f32.mrb[0].mxu0
      %v1460 = vpop.f32.mrb[0].mxu0
      %v1461 = vadd.f32 %v495, %v1460
      %v1462 = vpop.f32.mrb[0].mxu0
      %1463 = vmatprep.mubr.bf16.mxu0 0
      %1464 = vmatmul.mubr.bf16.gmra.mrb[0].mxu0 %v1014
      %v1465 = vpop.f32.mrb[0].mxu0
      %v1466 = vadd.f32 %v495, %v1465
      %v1467 = vpop.f32.mrb[0].mxu0
      %v1468 = vpop.f32.mrb[0].mxu0
      %v1469 = vadd.f32 %v495, %v1468
      %v1470 = vpop.f32.mrb[0].mxu0
      %1471 = vmatprep.mubr.bf16.mxu0 0
      %1472 = vmatmul.mubr.bf16.gmra.mrb[0].mxu0 %v1015
      %v1473 = vpop.f32.mrb[0].mxu0
      %v1474 = vadd.f32 %v495, %v1473
      %v1475 = vpop.f32.mrb[0].mxu0
      %v1476 = vpop.f32.mrb[0].mxu0
      %v1477 = vadd.f32 %v495, %v1476
      %v1478 = vpop.f32.mrb[0].mxu0
      %1479 = vmatprep.mubr.bf16.mxu0 0
      %1480 = vmatmul.mubr.bf16.gmra.mrb[0].mxu0 %v1016
      %v1481 = vpop.f32.mrb[0].mxu0
      %v1482 = vadd.f32 %v495, %v1481
      %v1483 = vpop.f32.mrb[0].mxu0
      %v1484 = vpop.f32.mrb[0].mxu0
      %v1485 = vadd.f32 %v495, %v1484
      %v1486 = vpop.f32.mrb[0].mxu0
      %1487 = vmatprep.mubr.bf16.mxu0 0
      %1488 = vmatmul.mubr.bf16.gmra.mrb[0].mxu0 %v1017
      %v1489 = vpop.f32.mrb[0].mxu0
      %v1490 = vadd.f32 %v495, %v1489
      %v1491 = vpop.f32.mrb[0].mxu0
      %v1492 = vpop.f32.mrb[0].mxu0
      %v1493 = vadd.f32 %v495, %v1492
      %v1494 = vpop.f32.mrb[0].mxu0
      %1495 = vmatprep.mubr.bf16.mxu0 0
      %1496 = vmatmul.mubr.bf16.gmra.mrb[0].mxu0 %v1018
      %v1497 = vpop.f32.mrb[0].mxu0
      %v1498 = vadd.f32 %v495, %v1497
      %v1499 = vpop.f32.mrb[0].mxu0
      %v1500 = vpop.f32.mrb[0].mxu0
      %v1501 = vadd.f32 %v495, %v1500
      %v1502 = vpop.f32.mrb[0].mxu0
      %1503 = vmatprep.mubr.bf16.mxu0 0
      %1504 = vmatmul.mubr.bf16.gmra.mrb[0].mxu0 %v1019
      %v1505 = vpop.f32.mrb[0].mxu0
      %v1506 = vadd.f32 %v495, %v1505
      %v1507 = vpop.f32.mrb[0].mxu0
      %v1508 = vpop.f32.mrb[0].mxu0
      %v1509 = vadd.f32 %v495, %v1508
      %v1510 = vpop.f32.mrb[0].mxu0
      %1511 = vmatprep.mubr.bf16.mxu0 0
      %1512 = vmatmul.mubr.bf16.gmra.mrb[0].mxu0 %v1020
      %v1513 = vpop.f32.mrb[0].mxu0
      %v1514 = vadd.f32 %v495, %v1513
      %v1515 = vpop.f32.mrb[0].mxu0
      %v1516 = vpop.f32.mrb[0].mxu0
      %v1517 = vadd.f32 %v495, %v1516
      %v1518 = vpop.f32.mrb[0].mxu0
      %1519 = vmatprep.mubr.bf16.mxu0 0
      %1520 = vmatmul.mubr.bf16.gmra.mrb[0].mxu0 %v1021
      %v1521 = vpop.f32.mrb[0].mxu0
      %v1522 = vadd.f32 %v495, %v1521
      %v1523 = vpop.f32.mrb[0].mxu0
      %v1524 = vpop.f32.mrb[0].mxu0
      %v1525 = vadd.f32 %v495, %v1524
      %v1526 = vpop.f32.mrb[0].mxu0
      %1527 = vmatprep.mubr.bf16.mxu0 0
      %1528 = vmatmul.mubr.bf16.gmra.mrb[0].mxu0 %v1022
      %v1529 = vpop.f32.mrb[0].mxu0
      %v1530 = vadd.f32 %v495, %v1529
      %v1531 = vpop.f32.mrb[0].mxu0
      %v1532 = vpop.f32.mrb[0].mxu0
      %v1533 = vadd.f32 %v495, %v1532
      %v1534 = vpop.f32.mrb[0].mxu0
      %1535 = vmatprep.mubr.bf16.mxu0 0
      %1536 = vmatmul.mubr.bf16.gmra.mrb[0].mxu0 %v1023
      %v1537 = vpop.f32.mrb[0].mxu0
      %v1538 = vadd.f32 %v495, %v1537
      %v1539 = vpop.f32.mrb[0].mxu0
      %v1540 = vpop.f32.mrb[0].mxu0
      %v1541 = vadd.f32 %v495, %v1540
      %v1542 = vpop.f32.mrb[0].mxu0
      %1543 = vmatprep.mubr.bf16.mxu0 0
      %1544 = vmatmul.mubr.bf16.gmra.mrb[0].mxu0 %v1024
      %v1545 = vpop.f32.mrb[0].mxu0
      %v1546 = vadd.f32 %v495, %v1545
      %v1547 = vpop.f32.mrb[0].mxu0
      %v1548 = vpop.f32.mrb[0].mxu0
      %v1549 = vadd.f32 %v495, %v1548
      %v1550 = vpop.f32.mrb[0].mxu0
      %1551 = vmatprep.mubr.bf16.mxu0 0
      %1552 = vmatmul.mubr.bf16.gmra.mrb[0].mxu0 %v1025
      %v1553 = vpop.f32.mrb[0].mxu0
      %v1554 = vadd.f32 %v495, %v1553
      %v1555 = vpop.f32.mrb[0].mxu0
      %v1556 = vpop.f32.mrb[0].mxu0
      %v1557 = vadd.f32 %v495, %v1556
      %v1558 = vpop.f32.mrb[0].mxu0
      %1559 = vmatprep.mubr.bf16.mxu0 0
      %1560 = vmatmul.mubr.bf16.gmra.mrb[0].mxu0 %v1026
      %v1561 = vpop.f32.mrb[0].mxu0
      %v1562 = vadd.f32 %v495, %v1561
      %v1563 = vpop.f32.mrb[0].mxu0
      %v1564 = vpop.f32.mrb[0].mxu0
      %v1565 = vadd.f32 %v495, %v1564
      %v1566 = vpop.f32.mrb[0].mxu0
      %1567 = vmatprep.mubr.bf16.mxu0 0
      %1568 = vmatmul.mubr.bf16.gmra.mrb[0].mxu0 %v1027
      %v1569 = vpop.f32.mrb[0].mxu0
      %v1570 = vadd.f32 %v495, %v1569
      %v1571 = vpop.f32.mrb[0].mxu0
      %v1572 = vpop.f32.mrb[0].mxu0
      %v1573 = vadd.f32 %v495, %v1572
      %v1574 = vpop.f32.mrb[0].mxu0
      %1575 = vmatprep.mubr.bf16.mxu0 0
      %1576 = vmatmul.mubr.bf16.gmra.mrb[0].mxu0 %v1028
      %v1577 = vpop.f32.mrb[0].mxu0
      %v1578 = vadd.f32 %v495, %v1577
      %v1579 = vpop.f32.mrb[0].mxu0
      %v1580 = vpop.f32.mrb[0].mxu0
      %v1581 = vadd.f32 %v495, %v1580
      %v1582 = vpop.f32.mrb[0].mxu0
      %1583 = vmatprep.mubr.bf16.mxu0 0
      %1584 = vmatmul.mubr.bf16.gmra.mrb[0].mxu0 %v1029
      %v1585 = vpop.f32.mrb[0].mxu0
      %v1586 = vadd.f32 %v495, %v1585
      %v1587 = vpop.f32.mrb[0].mxu0
      %v1588 = vpop.f32.mrb[0].mxu0
      %v1589 = vadd.f32 %v495, %v1588
      %v1590 = vpop.f32.mrb[0].mxu0
      %1591 = vmatprep.mubr.bf16.mxu0 0
      %1592 = vmatmul.mubr.bf16.gmra.mrb[0].mxu0 %v1030
      %v1593 = vpop.f32.mrb[0].mxu0
      %v1594 = vadd.f32 %v495, %v1593
      %v1595 = vpop.f32.mrb[0].mxu0
      %v1596 = vpop.f32.mrb[0].mxu0
      %v1597 = vadd.f32 %v495, %v1596
      %v1598 = vpop.f32.mrb[0].mxu0
      %1599 = vmatprep.mubr.bf16.mxu0 0
      %1600 = vmatmul.mubr.bf16.gmra.mrb[0].mxu0 %v1031
      %v1601 = vpop.f32.mrb[0].mxu0
      %v1602 = vadd.f32 %v495, %v1601
      %v1603 = vpop.f32.mrb[0].mxu0
      %v1604 = vpop.f32.mrb[0].mxu0
      %v1605 = vadd.f32 %v495, %v1604
      %v1606 = vpop.f32.mrb[0].mxu0
      %1607 = vmatprep.mubr.bf16.mxu0 0
      %1608 = vmatmul.mubr.bf16.gmra.mrb[0].mxu0 %v1032
      %v1609 = vpop.f32.mrb[0].mxu0
      %v1610 = vadd.f32 %v495, %v1609
      %v1611 = vpop.f32.mrb[0].mxu0
      %v1612 = vpop.f32.mrb[0].mxu0
      %v1613 = vadd.f32 %v495, %v1612
      %v1614 = vpop.f32.mrb[0].mxu0
      %1615 = vmatprep.mubr.bf16.mxu0 0
      %1616 = vmatmul.mubr.bf16.gmra.mrb[0].mxu0 %v1033
      %v1617 = vpop.f32.mrb[0].mxu0
      %v1618 = vadd.f32 %v495, %v1617
      %v1619 = vpop.f32.mrb[0].mxu0
      %v1620 = vpop.f32.mrb[0].mxu0
      %v1621 = vadd.f32 %v495, %v1620
      %v1622 = vpop.f32.mrb[0].mxu0
      %1623 = vmatprep.mubr.bf16.mxu0 0
      %1624 = vmatmul.mubr.bf16.gmra.mrb[0].mxu0 %v1034
      %v1625 = vpop.f32.mrb[0].mxu0
      %v1626 = vadd.f32 %v495, %v1625
      %v1627 = vpop.f32.mrb[0].mxu0
      %v1628 = vpop.f32.mrb[0].mxu0
      %v1629 = vadd.f32 %v495, %v1628
      %v1630 = vpop.f32.mrb[0].mxu0
      %1631 = vmatprep.mubr.bf16.mxu0 0
      %1632 = vmatmul.mubr.bf16.gmra.mrb[0].mxu0 %v1035
      %v1633 = vpop.f32.mrb[0].mxu0
      %v1634 = vadd.f32 %v495, %v1633
      %v1635 = vpop.f32.mrb[0].mxu0
      %v1636 = vpop.f32.mrb[0].mxu0
      %v1637 = vadd.f32 %v495, %v1636
      %v1638 = vpop.f32.mrb[0].mxu0
      %1639 = vmatprep.mubr.bf16.mxu0 0
      %1640 = vmatmul.mubr.bf16.gmra.mrb[0].mxu0 %v1036
      %v1641 = vpop.f32.mrb[0].mxu0
      %v1642 = vadd.f32 %v495, %v1641
      %v1643 = vpop.f32.mrb[0].mxu0
      %v1644 = vpop.f32.mrb[0].mxu0
      %v1645 = vadd.f32 %v495, %v1644
      %v1646 = vpop.f32.mrb[0].mxu0
      %1647 = vmatprep.mubr.bf16.mxu0 0
      %1648 = vmatmul.mubr.bf16.gmra.mrb[0].mxu0 %v1037
      %v1649 = vpop.f32.mrb[0].mxu0
      %v1650 = vadd.f32 %v495, %v1649
      %v1651 = vpop.f32.mrb[0].mxu0
      %v1652 = vpop.f32.mrb[0].mxu0
      %v1653 = vadd.f32 %v495, %v1652
      %v1654 = vpop.f32.mrb[0].mxu0
      %1655 = vmatprep.mubr.bf16.mxu0 0
      %1656 = vmatmul.mubr.bf16.gmra.mrb[0].mxu0 %v1038
      %v1657 = vpop.f32.mrb[0].mxu0
      %v1658 = vadd.f32 %v495, %v1657
      %v1659 = vpop.f32.mrb[0].mxu0
      %v1660 = vpop.f32.mrb[0].mxu0
      %v1661 = vadd.f32 %v495, %v1660
      %v1662 = vpop.f32.mrb[0].mxu0
      %1663 = vmatprep.mubr.bf16.mxu0 0
      %1664 = vmatmul.mubr.bf16.gmra.mrb[0].mxu0 %v1039
      %v1665 = vpop.f32.mrb[0].mxu0
      %v1666 = vadd.f32 %v495, %v1665
      %v1667 = vpop.f32.mrb[0].mxu0
      %v1668 = vpop.f32.mrb[0].mxu0
      %v1669 = vadd.f32 %v495, %v1668
      %v1670 = vpop.f32.mrb[0].mxu0
      %1671 = vmatprep.mubr.bf16.mxu0 0
      %1672 = vmatmul.mubr.bf16.gmra.mrb[0].mxu0 %v1040
      %v1673 = vpop.f32.mrb[0].mxu0
      %v1674 = vadd.f32 %v495, %v1673
      %v1675 = vpop.f32.mrb[0].mxu0
      %v1676 = vpop.f32.mrb[0].mxu0
      %v1677 = vadd.f32 %v495, %v1676
      %v1678 = vpop.f32.mrb[0].mxu0
      %1679 = vmatprep.mubr.bf16.mxu0 0
      %1680 = vmatmul.mubr.bf16.gmra.mrb[0].mxu0 %v1041
      %v1681 = vpop.f32.mrb[0].mxu0
      %v1682 = vadd.f32 %v495, %v1681
      %v1683 = vpop.f32.mrb[0].mxu0
      %v1684 = vpop.f32.mrb[0].mxu0
      %v1685 = vadd.f32 %v495, %v1684
      %v1686 = vpop.f32.mrb[0].mxu0
      %1687 = vmatprep.mubr.bf16.mxu0 0
      %1688 = vmatmul.mubr.bf16.gmra.mrb[0].mxu0 %v1042
      %v1689 = vpop.f32.mrb[0].mxu0
      %v1690 = vadd.f32 %v495, %v1689
      %v1691 = vpop.f32.mrb[0].mxu0
      %v1692 = vpop.f32.mrb[0].mxu0
      %v1693 = vadd.f32 %v495, %v1692
      %v1694 = vpop.f32.mrb[0].mxu0
      %1695 = vmatprep.mubr.bf16.mxu0 0
      %1696 = vmatmul.mubr.bf16.gmra.mrb[0].mxu0 %v1043
      %v1697 = vpop.f32.mrb[0].mxu0
      %v1698 = vadd.f32 %v495, %v1697
      %v1699 = vpop.f32.mrb[0].mxu0
      %v1700 = vpop.f32.mrb[0].mxu0
      %v1701 = vadd.f32 %v495, %v1700
      %v1702 = vpop.f32.mrb[0].mxu0
      %1703 = vmatprep.mubr.bf16.mxu0 0
      %1704 = vmatmul.mubr.bf16.gmra.mrb[0].mxu0 %v1044
      %v1705 = vpop.f32.mrb[0].mxu0
      %v1706 = vadd.f32 %v495, %v1705
      %v1707 = vpop.f32.mrb[0].mxu0
      %v1708 = vpop.f32.mrb[0].mxu0
      %v1709 = vadd.f32 %v495, %v1708
      %v1710 = vpop.f32.mrb[0].mxu0
      %1711 = vmatprep.mubr.bf16.mxu0 0
      %1712 = vmatmul.mubr.bf16.gmra.mrb[0].mxu0 %v1045
      %v1713 = vpop.f32.mrb[0].mxu0
      %v1714 = vadd.f32 %v495, %v1713
      %v1715 = vpop.f32.mrb[0].mxu0
      %v1716 = vpop.f32.mrb[0].mxu0
      %v1717 = vadd.f32 %v495, %v1716
      %v1718 = vpop.f32.mrb[0].mxu0
      %1719 = vmatprep.mubr.bf16.mxu0 0
      %1720 = vmatmul.mubr.bf16.gmra.mrb[0].mxu0 %v1046
      %v1721 = vpop.f32.mrb[0].mxu0
      %v1722 = vadd.f32 %v495, %v1721
      %v1723 = vpop.f32.mrb[0].mxu0
      %v1724 = vpop.f32.mrb[0].mxu0
      %v1725 = vadd.f32 %v495, %v1724
      %v1726 = vpop.f32.mrb[0].mxu0
      %1727 = vmatprep.mubr.bf16.mxu0 0
      %1728 = vmatmul.mubr.bf16.gmra.mrb[0].mxu0 %v1047
      %v1729 = vpop.f32.mrb[0].mxu0
      %v1730 = vadd.f32 %v495, %v1729
      %v1731 = vpop.f32.mrb[0].mxu0
      %v1732 = vpop.f32.mrb[0].mxu0
      %v1733 = vadd.f32 %v495, %v1732
      %v1734 = vpop.f32.mrb[0].mxu0
      %1735 = vmatprep.mubr.bf16.mxu0 0
      %1736 = vmatmul.mubr.bf16.gmra.mrb[0].mxu0 %v1048
      %v1737 = vpop.f32.mrb[0].mxu0
      %v1738 = vadd.f32 %v495, %v1737
      %v1739 = vpop.f32.mrb[0].mxu0
      %v1740 = vpop.f32.mrb[0].mxu0
      %v1741 = vadd.f32 %v495, %v1740
      %v1742 = vpop.f32.mrb[0].mxu0
      %1743 = vmatprep.mubr.bf16.mxu0 0
      %1744 = vmatmul.mubr.bf16.gmra.mrb[0].mxu0 %v1049
      %v1745 = vpop.f32.mrb[0].mxu0
      %v1746 = vadd.f32 %v495, %v1745
      %v1747 = vpop.f32.mrb[0].mxu0
      %v1748 = vpop.f32.mrb[0].mxu0
      %v1749 = vadd.f32 %v495, %v1748
      %v1750 = vpop.f32.mrb[0].mxu0
      %1751 = vmatprep.mubr.bf16.mxu0 0
      %1752 = vmatmul.mubr.bf16.gmra.mrb[0].mxu0 %v1050
      %v1753 = vpop.f32.mrb[0].mxu0
      %v1754 = vadd.f32 %v495, %v1753
      %v1755 = vpop.f32.mrb[0].mxu0
      %v1756 = vpop.f32.mrb[0].mxu0
      %v1757 = vadd.f32 %v495, %v1756
      %v1758 = vpop.f32.mrb[0].mxu0
      %1759 = vmatprep.mubr.bf16.mxu0 0
      %1760 = vmatmul.mubr.bf16.gmra.mrb[0].mxu0 %v1051
      %v1761 = vpop.f32.mrb[0].mxu0
      %v1762 = vadd.f32 %v495, %v1761
      %v1763 = vpop.f32.mrb[0].mxu0
      %v1764 = vpop.f32.mrb[0].mxu0
      %v1765 = vadd.f32 %v495, %v1764
      %v1766 = vpop.f32.mrb[0].mxu0
      %1767 = vmatprep.mubr.bf16.mxu0 0
      %1768 = vmatmul.mubr.bf16.gmra.mrb[0].mxu0 %v1052
      %v1769 = vpop.f32.mrb[0].mxu0
      %v1770 = vadd.f32 %v495, %v1769
      %v1771 = vpop.f32.mrb[0].mxu0
      %v1772 = vpop.f32.mrb[0].mxu0
      %v1773 = vadd.f32 %v495, %v1772
      %v1774 = vpop.f32.mrb[0].mxu0
      %1775 = vmatprep.mubr.bf16.mxu0 0
      %1776 = vmatmul.mubr.bf16.gmra.mrb[0].mxu0 %v1053
      %v1777 = vpop.f32.mrb[0].mxu0
      %v1778 = vadd.f32 %v495, %v1777
      %v1779 = vpop.f32.mrb[0].mxu0
      %v1780 = vpop.f32.mrb[0].mxu0
      %v1781 = vadd.f32 %v495, %v1780
      %v1782 = vpop.f32.mrb[0].mxu0
      %1783 = vmatprep.mubr.bf16.mxu0 0
      %1784 = vmatmul.mubr.bf16.gmra.mrb[0].mxu0 %v1054
      %v1785 = vpop.f32.mrb[0].mxu0
      %v1786 = vadd.f32 %v495, %v1785
      %v1787 = vpop.f32.mrb[0].mxu0
      %v1788 = vpop.f32.mrb[0].mxu0
      %v1789 = vadd.f32 %v495, %v1788
      %v1790 = vpop.f32.mrb[0].mxu0
      %1791 = vmatprep.mubr.bf16.mxu0 0
      %1792 = vmatmul.mubr.bf16.gmra.mrb[0].mxu0 %v1055
      %v1793 = vpop.f32.mrb[0].mxu0
      %v1794 = vadd.f32 %v495, %v1793
      %v1795 = vpop.f32.mrb[0].mxu0
      %v1796 = vpop.f32.mrb[0].mxu0
      %v1797 = vadd.f32 %v495, %v1796
      %v1798 = vpop.f32.mrb[0].mxu0
      %1799 = vmatprep.mubr.bf16.mxu0 0
      %1800 = vmatmul.mubr.bf16.gmra.mrb[0].mxu0 %v1056
      %v1801 = vpop.f32.mrb[0].mxu0
      %v1802 = vadd.f32 %v495, %v1801
      %v1803 = vpop.f32.mrb[0].mxu0
      %v1804 = vpop.f32.mrb[0].mxu0
      %v1805 = vadd.f32 %v495, %v1804
      %v1806 = vpop.f32.mrb[0].mxu0
      %1807 = vmatprep.mubr.bf16.mxu0 0
      %1808 = vmatmul.mubr.bf16.gmra.mrb[0].mxu0 %v1057
      %v1809 = vpop.f32.mrb[0].mxu0
      %v1810 = vadd.f32 %v495, %v1809
      %v1811 = vpop.f32.mrb[0].mxu0
      %v1812 = vpop.f32.mrb[0].mxu0
      %v1813 = vadd.f32 %v495, %v1812
      %v1814 = vpop.f32.mrb[0].mxu0
      %1815 = vmatprep.mubr.bf16.mxu0 0
      %1816 = vmatmul.mubr.bf16.gmra.mrb[0].mxu0 %v1058
      %v1817 = vpop.f32.mrb[0].mxu0
      %v1818 = vadd.f32 %v495, %v1817
      %v1819 = vpop.f32.mrb[0].mxu0
      %v1820 = vpop.f32.mrb[0].mxu0
      %v1821 = vadd.f32 %v495, %v1820
      %v1822 = vpop.f32.mrb[0].mxu0
      %1823 = vmatprep.mubr.bf16.mxu0 0
      %1824 = vmatmul.mubr.bf16.gmra.mrb[0].mxu0 %v1059
      %v1825 = vpop.f32.mrb[0].mxu0
      %v1826 = vadd.f32 %v495, %v1825
      %v1827 = vpop.f32.mrb[0].mxu0
      %v1828 = vpop.f32.mrb[0].mxu0
      %v1829 = vadd.f32 %v495, %v1828
      %v1830 = vpop.f32.mrb[0].mxu0
      %1831 = vmatprep.mubr.bf16.mxu0 0
      %1832 = vmatmul.mubr.bf16.gmra.mrb[0].mxu0 %v1060
      %v1833 = vpop.f32.mrb[0].mxu0
      %v1834 = vadd.f32 %v495, %v1833
      %v1835 = vpop.f32.mrb[0].mxu0
      %v1836 = vpop.f32.mrb[0].mxu0
      %v1837 = vadd.f32 %v495, %v1836
      %v1838 = vpop.f32.mrb[0].mxu0
      %1839 = vmatprep.mubr.bf16.mxu0 0
      %1840 = vmatmul.mubr.bf16.gmra.mrb[0].mxu0 %v1061
      %v1841 = vpop.f32.mrb[0].mxu0
      %v1842 = vadd.f32 %v495, %v1841
      %v1843 = vpop.f32.mrb[0].mxu0
      %v1844 = vpop.f32.mrb[0].mxu0
      %v1845 = vadd.f32 %v495, %v1844
      %v1846 = vpop.f32.mrb[0].mxu0
      %1847 = vmatprep.mubr.bf16.mxu0 0
      %1848 = vmatmul.mubr.bf16.gmra.mrb[0].mxu0 %v1062
      %v1849 = vpop.f32.mrb[0].mxu0
      %v1850 = vadd.f32 %v495, %v1849
      %v1851 = vpop.f32.mrb[0].mxu0
      %v1852 = vpop.f32.mrb[0].mxu0
      %v1853 = vadd.f32 %v495, %v1852
      %v1854 = vpop.f32.mrb[0].mxu0
      %1855 = vmatprep.mubr.bf16.mxu0 0
      %1856 = vmatmul.mubr.bf16.gmra.mrb[0].mxu0 %v1063
      %v1857 = vpop.f32.mrb[0].mxu0
      %v1858 = vadd.f32 %v495, %v1857
      %v1859 = vpop.f32.mrb[0].mxu0
      %v1860 = vpop.f32.mrb[0].mxu0
      %v1861 = vadd.f32 %v495, %v1860
      %v1862 = vpop.f32.mrb[0].mxu0
      %1863 = vmatprep.mubr.bf16.mxu0 0
      %1864 = vmatmul.mubr.bf16.gmra.mrb[0].mxu0 %v1064
      %v1865 = vpop.f32.mrb[0].mxu0
      %v1866 = vadd.f32 %v495, %v1865
      %v1867 = vpop.f32.mrb[0].mxu0
      %v1868 = vpop.f32.mrb[0].mxu0
      %v1869 = vadd.f32 %v495, %v1868
      %v1870 = vpop.f32.mrb[0].mxu0
      %1871 = vmatprep.mubr.bf16.mxu0 0
      %1872 = vmatmul.mubr.bf16.gmra.mrb[0].mxu0 %v1065
      %v1873 = vpop.f32.mrb[0].mxu0
      %v1874 = vadd.f32 %v495, %v1873
      %v1875 = vpop.f32.mrb[0].mxu0
      %v1876 = vpop.f32.mrb[0].mxu0
      %v1877 = vadd.f32 %v495, %v1876
      %v1878 = vpop.f32.mrb[0].mxu0
      %1879 = vmatprep.mubr.bf16.mxu0 0
      %1880 = vmatmul.mubr.bf16.gmra.mrb[0].mxu0 %v1066
      %v1881 = vpop.f32.mrb[0].mxu0
      %v1882 = vadd.f32 %v495, %v1881
      %v1883 = vpop.f32.mrb[0].mxu0
      %v1884 = vpop.f32.mrb[0].mxu0
      %v1885 = vadd.f32 %v495, %v1884
      %v1886 = vpop.f32.mrb[0].mxu0
      %1887 = vmatprep.mubr.bf16.mxu0 0
      %1888 = vmatmul.mubr.bf16.gmra.mrb[0].mxu0 %v1067
      %v1889 = vpop.f32.mrb[0].mxu0
      %v1890 = vadd.f32 %v495, %v1889
      %v1891 = vpop.f32.mrb[0].mxu0
      %v1892 = vpop.f32.mrb[0].mxu0
      %v1893 = vadd.f32 %v495, %v1892
      %v1894 = vpop.f32.mrb[0].mxu0
      %1895 = vmatprep.mubr.bf16.mxu0 0
      %1896 = vmatmul.mubr.bf16.gmra.mrb[0].mxu0 %v1068
      %v1897 = vpop.f32.mrb[0].mxu0
      %v1898 = vadd.f32 %v495, %v1897
      %v1899 = vpop.f32.mrb[0].mxu0
      %v1900 = vpop.f32.mrb[0].mxu0
      %v1901 = vadd.f32 %v495, %v1900
      %v1902 = vpop.f32.mrb[0].mxu0
      %1903 = vmatprep.mubr.bf16.mxu0 0
      %1904 = vmatmul.mubr.bf16.gmra.mrb[0].mxu0 %v1069
      %v1905 = vpop.f32.mrb[0].mxu0
      %v1906 = vadd.f32 %v495, %v1905
      %v1907 = vpop.f32.mrb[0].mxu0
      %v1908 = vpop.f32.mrb[0].mxu0
      %v1909 = vadd.f32 %v495, %v1908
      %v1910 = vpop.f32.mrb[0].mxu0
      %1911 = vmatprep.mubr.bf16.mxu0 0
      %1912 = vmatmul.mubr.bf16.gmra.mrb[0].mxu0 %v1070
      %v1913 = vpop.f32.mrb[0].mxu0
      %v1914 = vadd.f32 %v495, %v1913
      %v1915 = vpop.f32.mrb[0].mxu0
      %v1916 = vpop.f32.mrb[0].mxu0
      %v1917 = vadd.f32 %v495, %v1916
      %v1918 = vpop.f32.mrb[0].mxu0
      %1919 = vmatprep.mubr.bf16.mxu0 0
      %1920 = vmatmul.mubr.bf16.gmra.mrb[0].mxu0 %v1071
      %v1921 = vpop.f32.mrb[0].mxu0
      %v1922 = vadd.f32 %v495, %v1921
      %v1923 = vpop.f32.mrb[0].mxu0
      %v1924 = vpop.f32.mrb[0].mxu0
      %v1925 = vadd.f32 %v495, %v1924
      %v1926 = vpop.f32.mrb[0].mxu0
      %1927 = vmatprep.mubr.bf16.mxu0 0
      %1928 = vmatmul.mubr.bf16.gmra.mrb[0].mxu0 %v1072
      %v1929 = vpop.f32.mrb[0].mxu0
      %v1930 = vadd.f32 %v495, %v1929
      %v1931 = vpop.f32.mrb[0].mxu0
      %v1932 = vpop.f32.mrb[0].mxu0
      %v1933 = vadd.f32 %v495, %v1932
      %v1934 = vpop.f32.mrb[0].mxu0
      %1935 = vmatprep.mubr.bf16.mxu0 0
      %1936 = vmatmul.mubr.bf16.gmra.mrb[0].mxu0 %v1073
      %v1937 = vpop.f32.mrb[0].mxu0
      %v1938 = vadd.f32 %v495, %v1937
      %v1939 = vpop.f32.mrb[0].mxu0
      %v1940 = vpop.f32.mrb[0].mxu0
      %v1941 = vadd.f32 %v495, %v1940
      %v1942 = vpop.f32.mrb[0].mxu0
      %1943 = vmatprep.mubr.bf16.mxu0 0
      %1944 = vmatmul.mubr.bf16.gmra.mrb[0].mxu0 %v1074
      %v1945 = vpop.f32.mrb[0].mxu0
      %v1946 = vadd.f32 %v495, %v1945
      %v1947 = vpop.f32.mrb[0].mxu0
      %v1948 = vpop.f32.mrb[0].mxu0
      %v1949 = vadd.f32 %v495, %v1948
      %v1950 = vpop.f32.mrb[0].mxu0
      %1951 = vmatprep.mubr.bf16.mxu0 0
      %1952 = vmatmul.mubr.bf16.gmra.mrb[0].mxu0 %v1075
      %v1953 = vpop.f32.mrb[0].mxu0
      %v1954 = vadd.f32 %v495, %v1953
      %v1955 = vpop.f32.mrb[0].mxu0
      %v1956 = vpop.f32.mrb[0].mxu0
      %v1957 = vadd.f32 %v495, %v1956
      %v1958 = vpop.f32.mrb[0].mxu0
      %1959 = vmatprep.mubr.bf16.mxu0 0
      %1960 = vmatmul.mubr.bf16.gmra.mrb[0].mxu0 %v1076
      %v1961 = vpop.f32.mrb[0].mxu0
      %v1962 = vadd.f32 %v495, %v1961
      %v1963 = vpop.f32.mrb[0].mxu0
      %v1964 = vpop.f32.mrb[0].mxu0
      %v1965 = vadd.f32 %v495, %v1964
      %v1966 = vpop.f32.mrb[0].mxu0
      %1967 = vmatprep.mubr.bf16.mxu0 0
      %1968 = vmatmul.mubr.bf16.gmra.mrb[0].mxu0 %v1077
      %v1969 = vpop.f32.mrb[0].mxu0
      %v1970 = vadd.f32 %v495, %v1969
      %v1971 = vpop.f32.mrb[0].mxu0
      %v1972 = vpop.f32.mrb[0].mxu0
      %v1973 = vadd.f32 %v495, %v1972
      %v1974 = vpop.f32.mrb[0].mxu0
      %1975 = vmatprep.mubr.bf16.mxu0 0
      %1976 = vmatmul.mubr.bf16.gmra.mrb[0].mxu0 %v1078
      %v1977 = vpop.f32.mrb[0].mxu0
      %v1978 = vadd.f32 %v495, %v1977
      %v1979 = vpop.f32.mrb[0].mxu0
      %v1980 = vpop.f32.mrb[0].mxu0
      %v1981 = vadd.f32 %v495, %v1980
      %v1982 = vpop.f32.mrb[0].mxu0
      %1983 = vmatprep.mubr.bf16.mxu0 0
      %1984 = vmatmul.mubr.bf16.gmra.mrb[0].mxu0 %v1079
      %v1985 = vpop.f32.mrb[0].mxu0
      %v1986 = vadd.f32 %v495, %v1985
      %v1987 = vpop.f32.mrb[0].mxu0
      %v1988 = vpop.f32.mrb[0].mxu0
      %v1989 = vadd.f32 %v495, %v1988
      %v1990 = vpop.f32.mrb[0].mxu0
      %1991 = vmatprep.mubr.bf16.mxu0 0
      %1992 = vmatmul.mubr.bf16.gmra.mrb[0].mxu0 %v1080
      %v1993 = vpop.f32.mrb[0].mxu0
      %v1994 = vadd.f32 %v495, %v1993
      %v1995 = vpop.f32.mrb[0].mxu0
      %v1996 = vpop.f32.mrb[0].mxu0
      %v1997 = vadd.f32 %v495, %v1996
      %v1998 = vpop.f32.mrb[0].mxu0
      %1999 = vmatprep.mubr.bf16.mxu0 0
      %2000 = vmatmul.mubr.bf16.gmra.mrb[0].mxu0 %v1081
      %v2001 = vpop.f32.mrb[0].mxu0
      %v2002 = vadd.f32 %v495, %v2001
      %v2003 = vpop.f32.mrb[0].mxu0
      %v2004 = vpop.f32.mrb[0].mxu0
      %v2005 = vadd.f32 %v495, %v2004
      %v2006 = vpop.f32.mrb[0].mxu0
      %2007 = vmatprep.mubr.bf16.mxu0 0
      %2008 = vmatmul.mubr.bf16.gmra.mrb[0].mxu0 %v1082
      %v2009 = vpop.f32.mrb[0].mxu0
      %v2010 = vadd.f32 %v495, %v2009
      %v2011 = vpop.f32.mrb[0].mxu0
      %v2012 = vpop.f32.mrb[0].mxu0
      %v2013 = vadd.f32 %v495, %v2012
      %v2014 = vpop.f32.mrb[0].mxu0
      %2015 = vmatprep.mubr.bf16.mxu0 0
      %2016 = vmatmul.mubr.bf16.gmra.mrb[0].mxu0 %v1083
      %v2017 = vpop.f32.mrb[0].mxu0
      %v2018 = vadd.f32 %v495, %v2017
      %v2019 = vpop.f32.mrb[0].mxu0
      %v2020 = vpop.f32.mrb[0].mxu0
      %v2021 = vadd.f32 %v495, %v2020
      %v2022 = vpop.f32.mrb[0].mxu0
      %2023 = vmatprep.mubr.bf16.mxu0 0
      %2024 = vmatmul.mubr.bf16.gmra.mrb[0].mxu0 %v1084
      %v2025 = vpop.f32.mrb[0].mxu0
      %v2026 = vadd.f32 %v495, %v2025
      %v2027 = vpop.f32.mrb[0].mxu0
      %v2028 = vpop.f32.mrb[0].mxu0
      %v2029 = vadd.f32 %v495, %v2028
      %v2030 = vpop.f32.mrb[0].mxu0
      %2031 = vmatprep.mubr.bf16.mxu0 0
      %2032 = vmatmul.mubr.bf16.gmra.mrb[0].mxu0 %v1085
      %v2033 = vpop.f32.mrb[0].mxu0
      %v2034 = vadd.f32 %v495, %v2033
      %v2035 = vpop.f32.mrb[0].mxu0
      %v2036 = vpop.f32.mrb[0].mxu0
      %v2037 = vadd.f32 %v495, %v2036
      %v2038 = vpop.f32.mrb[0].mxu0
      %2039 = vmatprep.mubr.bf16.mxu0 0
      %2040 = vmatmul.mubr.bf16.gmra.mrb[0].mxu0 %v1086
      %v2041 = vpop.f32.mrb[0].mxu0
      %v2042 = vadd.f32 %v495, %v2041
      %v2043 = vpop.f32.mrb[0].mxu0
      %v2044 = vpop.f32.mrb[0].mxu0
      %v2045 = vadd.f32 %v495, %v2044
      %v2046 = vpop.f32.mrb[0].mxu0
      %2047 = vmatprep.mubr.bf16.mxu0 0
      %2048 = vmatmul.mubr.bf16.gmra.mrb[0].mxu0 %v1087
      %v2049 = vpop.f32.mrb[0].mxu0
      %v2050 = vadd.f32 %v495, %v2049
      %v2051 = vpop.f32.mrb[0].mxu0
      %v2052 = vpop.f32.mrb[0].mxu0
      %v2053 = vadd.f32 %v495, %v2052
      %v2054 = vpop.f32.mrb[0].mxu0
      %2055 = vmatprep.mubr.bf16.mxu0 0
      %2056 = vmatmul.mubr.bf16.gmra.mrb[0].mxu0 %v1088
      %v2057 = vpop.f32.mrb[0].mxu0
      %v2058 = vadd.f32 %v495, %v2057
      %v2059 = vpop.f32.mrb[0].mxu0
      %v2060 = vpop.f32.mrb[0].mxu0
      %v2061 = vadd.f32 %v495, %v2060
      %v2062 = vpop.f32.mrb[0].mxu0
      %2063 = vmatprep.mubr.bf16.mxu0 0
      %2064 = vmatmul.mubr.bf16.gmra.mrb[0].mxu0 %v1089
      %v2065 = vpop.f32.mrb[0].mxu0
      %v2066 = vadd.f32 %v495, %v2065
      %v2067 = vpop.f32.mrb[0].mxu0
      %v2068 = vpop.f32.mrb[0].mxu0
      %v2069 = vadd.f32 %v495, %v2068
      %v2070 = vpop.f32.mrb[0].mxu0
      %2071 = vmatprep.mubr.bf16.mxu0 0
      %2072 = vmatmul.mubr.bf16.gmra.mrb[0].mxu0 %v1090
      %v2073 = vpop.f32.mrb[0].mxu0
      %v2074 = vadd.f32 %v495, %v2073
      %v2075 = vpop.f32.mrb[0].mxu0
      %v2076 = vpop.f32.mrb[0].mxu0
      %v2077 = vadd.f32 %v495, %v2076
      %v2078 = vpop.f32.mrb[0].mxu0
      %2079 = vmatprep.mubr.bf16.mxu0 0
      %2080 = vmatmul.mubr.bf16.gmra.mrb[0].mxu0 %v1091
      %v2081 = vpop.f32.mrb[0].mxu0
      %v2082 = vadd.f32 %v495, %v2081
      %v2083 = vpop.f32.mrb[0].mxu0
      %v2084 = vpop.f32.mrb[0].mxu0
      %v2085 = vadd.f32 %v495, %v2084
      %v2086 = vpop.f32.mrb[0].mxu0
      %2087 = vmatprep.mubr.bf16.mxu0 0
      %2088 = vmatmul.mubr.bf16.gmra.mrb[0].mxu0 %v1092
      %v2089 = vpop.f32.mrb[0].mxu0
      %v2090 = vadd.f32 %v495, %v2089
      %v2091 = vpop.f32.mrb[0].mxu0
      %v2092 = vpop.f32.mrb[0].mxu0
      %v2093 = vadd.f32 %v495, %v2092
      %v2094 = vpop.f32.mrb[0].mxu0
      %2095 = vmatprep.mubr.bf16.mxu0 0
      %2096 = vmatmul.mubr.bf16.gmra.mrb[0].mxu0 %v1093
      %v2097 = vpop.f32.mrb[0].mxu0
      %v2098 = vadd.f32 %v495, %v2097
      %v2099 = vpop.f32.mrb[0].mxu0
      %v2100 = vpop.f32.mrb[0].mxu0
      %v2101 = vadd.f32 %v495, %v2100
      %v2102 = vpop.f32.mrb[0].mxu0
      %2103 = vmatprep.mubr.bf16.mxu0 0
      %2104 = vmatmul.mubr.bf16.gmra.mrb[0].mxu0 %v1094
      %v2105 = vpop.f32.mrb[0].mxu0
      %v2106 = vadd.f32 %v495, %v2105
      %v2107 = vpop.f32.mrb[0].mxu0
      %v2108 = vpop.f32.mrb[0].mxu0
      %v2109 = vadd.f32 %v495, %v2108
      %v2110 = vpop.f32.mrb[0].mxu0
      %2111 = vmatprep.mubr.bf16.mxu0 0
      %2112 = vmatmul.mubr.bf16.gmra.mrb[0].mxu0 %v1095
      %v2113 = vpop.f32.mrb[0].mxu0
      %v2114 = vadd.f32 %v495, %v2113
      %v2115 = vpop.f32.mrb[0].mxu0
      %v2116 = vpop.f32.mrb[0].mxu0
      %v2117 = vadd.f32 %v495, %v2116
      %v2118 = vpop.f32.mrb[0].mxu0
      %2119 = vmatprep.mubr.bf16.mxu0 0
      %2120 = vmatmul.mubr.bf16.gmra.mrb[0].mxu0 %v1096
      %v2121 = vpop.f32.mrb[0].mxu0
      %v2122 = vadd.f32 %v495, %v2121
      %v2123 = vpop.f32.mrb[0].mxu0
      %v2124 = vpop.f32.mrb[0].mxu0
      %v2125 = vadd.f32 %v495, %v2124
      %v2126 = vpop.f32.mrb[0].mxu0
      %2127 = vmatprep.mubr.bf16.mxu0 0
      %2128 = vmatmul.mubr.bf16.gmra.mrb[0].mxu0 %v1097
      %v2129 = vpop.f32.mrb[0].mxu0
      %v2130 = vadd.f32 %v495, %v2129
      %v2131 = vpop.f32.mrb[0].mxu0
      %v2132 = vpop.f32.mrb[0].mxu0
      %v2133 = vadd.f32 %v495, %v2132
      %v2134 = vpop.f32.mrb[0].mxu0
      %2135 = vmatprep.mubr.bf16.mxu0 0
      %2136 = vmatmul.mubr.bf16.gmra.mrb[0].mxu0 %v1098
      %v2137 = vpop.f32.mrb[0].mxu0
      %v2138 = vadd.f32 %v495, %v2137
      %v2139 = vpop.f32.mrb[0].mxu0
      %v2140 = vpop.f32.mrb[0].mxu0
      %v2141 = vadd.f32 %v495, %v2140
      %v2142 = vpop.f32.mrb[0].mxu0
      %2143 = vmatprep.mubr.bf16.mxu0 0
      %2144 = vmatmul.mubr.bf16.gmra.mrb[0].mxu0 %v1099
      %v2145 = vpop.f32.mrb[0].mxu0
      %v2146 = vadd.f32 %v495, %v2145
      %v2147 = vpop.f32.mrb[0].mxu0
      %v2148 = vpop.f32.mrb[0].mxu0
      %v2149 = vadd.f32 %v495, %v2148
      %v2150 = vpop.f32.mrb[0].mxu0
      %2151 = vmatprep.mubr.bf16.mxu0 0
      %2152 = vmatmul.mubr.bf16.gmra.mrb[0].mxu0 %v1100
      %v2153 = vpop.f32.mrb[0].mxu0
      %v2154 = vadd.f32 %v495, %v2153
      %v2155 = vpop.f32.mrb[0].mxu0
      %v2156 = vpop.f32.mrb[0].mxu0
      %v2157 = vadd.f32 %v495, %v2156
      %v2158 = vpop.f32.mrb[0].mxu0
      %2159 = vmatprep.mubr.bf16.mxu0 0
      %2160 = vmatmul.mubr.bf16.gmra.mrb[0].mxu0 %v1101
      %v2161 = vpop.f32.mrb[0].mxu0
      %v2162 = vadd.f32 %v495, %v2161
      %v2163 = vpop.f32.mrb[0].mxu0
      %v2164 = vpop.f32.mrb[0].mxu0
      %v2165 = vadd.f32 %v495, %v2164
      %v2166 = vpop.f32.mrb[0].mxu0
      %2167 = vmatprep.mubr.bf16.mxu0 0
      %2168 = vmatmul.mubr.bf16.gmra.mrb[0].mxu0 %v1102
      %v2169 = vpop.f32.mrb[0].mxu0
      %v2170 = vadd.f32 %v495, %v2169
      %v2171 = vpop.f32.mrb[0].mxu0
      %v2172 = vpop.f32.mrb[0].mxu0
      %v2173 = vadd.f32 %v495, %v2172
      %v2174 = vpop.f32.mrb[0].mxu0
      %2175 = vmatprep.mubr.bf16.mxu0 0
      %2176 = vmatmul.mubr.bf16.gmra.mrb[0].mxu0 %v1103
      %v2177 = vpop.f32.mrb[0].mxu0
      %v2178 = vadd.f32 %v495, %v2177
      %v2179 = vpop.f32.mrb[0].mxu0
      %v2180 = vpop.f32.mrb[0].mxu0
      %v2181 = vadd.f32 %v495, %v2180
      %v2182 = vpop.f32.mrb[0].mxu0
      %2183 = vmatprep.mubr.bf16.mxu0 0
      %2184 = vmatmul.mubr.bf16.gmra.mrb[0].mxu0 %v1104
      %v2185 = vpop.f32.mrb[0].mxu0
      %v2186 = vadd.f32 %v495, %v2185
      %v2187 = vpop.f32.mrb[0].mxu0
      %v2188 = vpop.f32.mrb[0].mxu0
      %v2189 = vadd.f32 %v495, %v2188
      %v2190 = vpop.f32.mrb[0].mxu0
      %2191 = vmatprep.mubr.bf16.mxu0 0
      %2192 = vmatmul.mubr.bf16.gmra.mrb[0].mxu0 %v1105
      %v2193 = vpop.f32.mrb[0].mxu0
      %v2194 = vadd.f32 %v495, %v2193
      %v2195 = vpop.f32.mrb[0].mxu0
      %v2196 = vpop.f32.mrb[0].mxu0
      %v2197 = vadd.f32 %v495, %v2196
      %v2198 = vpop.f32.mrb[0].mxu0
      %2199 = vmatprep.mubr.bf16.mxu0 0
      %2200 = vmatmul.mubr.bf16.gmra.mrb[0].mxu0 %v1106
      %v2201 = vpop.f32.mrb[0].mxu0
      %v2202 = vadd.f32 %v495, %v2201
      %v2203 = vpop.f32.mrb[0].mxu0
      %v2204 = vpop.f32.mrb[0].mxu0
      %v2205 = vadd.f32 %v495, %v2204
      %v2206 = vpop.f32.mrb[0].mxu0
      %2207 = vmatprep.mubr.bf16.mxu0 0
      %2208 = vmatmul.mubr.bf16.gmra.mrb[0].mxu0 %v1107
      %v2209 = vpop.f32.mrb[0].mxu0
      %v2210 = vadd.f32 %v495, %v2209
      %v2211 = vpop.f32.mrb[0].mxu0
      %v2212 = vpop.f32.mrb[0].mxu0
      %v2213 = vadd.f32 %v495, %v2212
      %v2214 = vpop.f32.mrb[0].mxu0
      %2215 = vmatprep.mubr.bf16.mxu0 0
      %2216 = vmatmul.mubr.bf16.gmra.mrb[0].mxu0 %v1108
      %v2217 = vpop.f32.mrb[0].mxu0
      %v2218 = vadd.f32 %v495, %v2217
      %v2219 = vpop.f32.mrb[0].mxu0
      %v2220 = vpop.f32.mrb[0].mxu0
      %v2221 = vadd.f32 %v495, %v2220
      %v2222 = vpop.f32.mrb[0].mxu0
      %2223 = vmatprep.mubr.bf16.mxu0 0
      %2224 = vmatmul.mubr.bf16.gmra.mrb[0].mxu0 %v1109
      %v2225 = vpop.f32.mrb[0].mxu0
      %v2226 = vadd.f32 %v495, %v2225
      %v2227 = vpop.f32.mrb[0].mxu0
      %v2228 = vpop.f32.mrb[0].mxu0
      %v2229 = vadd.f32 %v495, %v2228
      %v2230 = vpop.f32.mrb[0].mxu0
      %2231 = vmatprep.mubr.bf16.mxu0 0
      %2232 = vmatmul.mubr.bf16.gmra.mrb[0].mxu0 %v1110
      %v2233 = vpop.f32.mrb[0].mxu0
      %v2234 = vadd.f32 %v495, %v2233
      %v2235 = vpop.f32.mrb[0].mxu0
      %v2236 = vpop.f32.mrb[0].mxu0
      %v2237 = vadd.f32 %v495, %v2236
      %v2238 = vpop.f32.mrb[0].mxu0
      %2239 = vmatprep.mubr.bf16.mxu0 0
      %2240 = vmatmul.mubr.bf16.gmra.mrb[0].mxu0 %v1111
      %v2241 = vpop.f32.mrb[0].mxu0
      %v2242 = vadd.f32 %v495, %v2241
      %v2243 = vpop.f32.mrb[0].mxu0
      %v2244 = vpop.f32.mrb[0].mxu0
      %v2245 = vadd.f32 %v495, %v2244
      %v2246 = vpop.f32.mrb[0].mxu0
      %2247 = vmatprep.mubr.bf16.mxu0 0
      %2248 = vmatmul.mubr.bf16.gmra.mrb[0].mxu0 %v1112
      %v2249 = vpop.f32.mrb[0].mxu0
      %v2250 = vadd.f32 %v495, %v2249
      %v2251 = vpop.f32.mrb[0].mxu0
      %v2252 = vpop.f32.mrb[0].mxu0
      %v2253 = vadd.f32 %v495, %v2252
      %v2254 = vpop.f32.mrb[0].mxu0
      %2255 = vmatprep.mubr.bf16.mxu0 0
      %2256 = vmatmul.mubr.bf16.gmra.mrb[0].mxu0 %v1113
      %v2257 = vpop.f32.mrb[0].mxu0
      %v2258 = vadd.f32 %v495, %v2257
      %v2259 = vpop.f32.mrb[0].mxu0
      %v2260 = vpop.f32.mrb[0].mxu0
      %v2261 = vadd.f32 %v495, %v2260
      %v2262 = vpop.f32.mrb[0].mxu0
      %2263 = vmatprep.mubr.bf16.mxu0 0
      %2264 = vmatmul.mubr.bf16.gmra.mrb[0].mxu0 %v1114
      %v2265 = vpop.f32.mrb[0].mxu0
      %v2266 = vadd.f32 %v495, %v2265
      %v2267 = vpop.f32.mrb[0].mxu0
      %v2268 = vpop.f32.mrb[0].mxu0
      %v2269 = vadd.f32 %v495, %v2268
      %v2270 = vpop.f32.mrb[0].mxu0
      %2271 = vmatprep.mubr.bf16.mxu0 0
      %2272 = vmatmul.mubr.bf16.gmra.mrb[0].mxu0 %v1115
      %v2273 = vpop.f32.mrb[0].mxu0
      %v2274 = vadd.f32 %v495, %v2273
      %v2275 = vpop.f32.mrb[0].mxu0
      %v2276 = vpop.f32.mrb[0].mxu0
      %v2277 = vadd.f32 %v495, %v2276
      %v2278 = vpop.f32.mrb[0].mxu0
      %2279 = vmatprep.mubr.bf16.mxu0 0
      %2280 = vmatmul.mubr.bf16.gmra.mrb[0].mxu0 %v1116
      %v2281 = vpop.f32.mrb[0].mxu0
      %v2282 = vadd.f32 %v495, %v2281
      %v2283 = vpop.f32.mrb[0].mxu0
      %v2284 = vpop.f32.mrb[0].mxu0
      %v2285 = vadd.f32 %v495, %v2284
      %v2286 = vpop.f32.mrb[0].mxu0
      %2287 = vmatprep.mubr.bf16.mxu0 0
      %2288 = vmatmul.mubr.bf16.gmra.mrb[0].mxu0 %v1117
      %v2289 = vpop.f32.mrb[0].mxu0
      %v2290 = vadd.f32 %v495, %v2289
      %v2291 = vpop.f32.mrb[0].mxu0
      %v2292 = vpop.f32.mrb[0].mxu0
      %v2293 = vadd.f32 %v495, %v2292
      %v2294 = vpop.f32.mrb[0].mxu0
      %2295 = vmatprep.mubr.bf16.mxu0 0
      %2296 = vmatmul.mubr.bf16.gmra.mrb[0].mxu0 %v1118
      %v2297 = vpop.f32.mrb[0].mxu0
      %v2298 = vadd.f32 %v495, %v2297
      %v2299 = vpop.f32.mrb[0].mxu0
      %v2300 = vpop.f32.mrb[0].mxu0
      %v2301 = vadd.f32 %v495, %v2300
      %v2302 = vpop.f32.mrb[0].mxu0
      %2303 = vmatprep.mubr.bf16.mxu0 0
      %2304 = vmatmul.mubr.bf16.gmra.mrb[0].mxu0 %v1119
      %v2305 = vpop.f32.mrb[0].mxu0
      %v2306 = vadd.f32 %v495, %v2305
      %v2307 = vpop.f32.mrb[0].mxu0
      %v2308 = vpop.f32.mrb[0].mxu0
      %v2309 = vadd.f32 %v495, %v2308
      %v2310 = vpop.f32.mrb[0].mxu0
      %2311 = vmatprep.mubr.bf16.mxu0 0
      %2312 = vmatmul.mubr.bf16.gmra.mrb[0].mxu0 %v1120
      %v2313 = vpop.f32.mrb[0].mxu0
      %v2314 = vadd.f32 %v495, %v2313
      %v2315 = vpop.f32.mrb[0].mxu0
      %v2316 = vpop.f32.mrb[0].mxu0
      %v2317 = vadd.f32 %v495, %v2316
      %v2318 = vpop.f32.mrb[0].mxu0
      %2319 = vmatprep.mubr.bf16.mxu0 0
      %2320 = vmatmul.mubr.bf16.gmra.mrb[0].mxu0 %v1121
      %v2321 = vpop.f32.mrb[0].mxu0
      %v2322 = vadd.f32 %v495, %v2321
      %v2323 = vpop.f32.mrb[0].mxu0
      %v2324 = vpop.f32.mrb[0].mxu0
      %v2325 = vadd.f32 %v495, %v2324
      %v2326 = vpop.f32.mrb[0].mxu0
      %2327 = vdwg.mxu0
      %v2328 = vmax.f32 %v1330, 0.0
      %v2329 = vmax.f32 %v1333, 0.0
      %v2330 = vmax.f32 %v1338, 0.0
      %v2331 = vmax.f32 %v1341, 0.0
      %v2332 = vmax.f32 %v1346, 0.0
      %v2333 = vmax.f32 %v1349, 0.0
      %v2334 = vmax.f32 %v1354, 0.0
      %v2335 = vmax.f32 %v1357, 0.0
      %v2336 = vmax.f32 %v1362, 0.0
      %v2337 = vmax.f32 %v1365, 0.0
      %v2338 = vmax.f32 %v1370, 0.0
      %v2339 = vmax.f32 %v1373, 0.0
      %v2340 = vmax.f32 %v1378, 0.0
      %v2341 = vmax.f32 %v1381, 0.0
      %v2342 = vmax.f32 %v1386, 0.0
      %v2343 = vmax.f32 %v1389, 0.0
      %v2344 = vmax.f32 %v1394, 0.0
      %v2345 = vmax.f32 %v1397, 0.0
      %v2346 = vmax.f32 %v1402, 0.0
      %v2347 = vmax.f32 %v1405, 0.0
      %v2348 = vmax.f32 %v1410, 0.0
      %v2349 = vmax.f32 %v1413, 0.0
      %v2350 = vmax.f32 %v1418, 0.0
      %v2351 = vmax.f32 %v1421, 0.0
      %v2352 = vmax.f32 %v1426, 0.0
      %v2353 = vmax.f32 %v1429, 0.0
      %v2354 = vmax.f32 %v1434, 0.0
      %v2355 = vmax.f32 %v1437, 0.0
      %v2356 = vmax.f32 %v1442, 0.0
      %v2357 = vmax.f32 %v1445, 0.0
      %v2358 = vmax.f32 %v1450, 0.0
      %v2359 = vmax.f32 %v1453, 0.0
      %v2360 = vmax.f32 %v1458, 0.0
      %v2361 = vmax.f32 %v1461, 0.0
      %v2362 = vmax.f32 %v1466, 0.0
      %v2363 = vmax.f32 %v1469, 0.0
      %v2364 = vmax.f32 %v1474, 0.0
      %v2365 = vmax.f32 %v1477, 0.0
      %v2366 = vmax.f32 %v1482, 0.0
      %v2367 = vmax.f32 %v1485, 0.0
      %v2368 = vmax.f32 %v1490, 0.0
      %v2369 = vmax.f32 %v1493, 0.0
      %v2370 = vmax.f32 %v1498, 0.0
      %v2371 = vmax.f32 %v1501, 0.0
      %v2372 = vmax.f32 %v1506, 0.0
      %v2373 = vmax.f32 %v1509, 0.0
      %v2374 = vmax.f32 %v1514, 0.0
      %v2375 = vmax.f32 %v1517, 0.0
      %v2376 = vmax.f32 %v1522, 0.0
      %v2377 = vmax.f32 %v1525, 0.0
      %v2378 = vmax.f32 %v1530, 0.0
      %v2379 = vmax.f32 %v1533, 0.0
      %v2380 = vmax.f32 %v1538, 0.0
      %v2381 = vmax.f32 %v1541, 0.0
      %v2382 = vmax.f32 %v1546, 0.0
      %v2383 = vmax.f32 %v1549, 0.0
      %v2384 = vmax.f32 %v1554, 0.0
      %v2385 = vmax.f32 %v1557, 0.0
      %v2386 = vmax.f32 %v1562, 0.0
      %v2387 = vmax.f32 %v1565, 0.0
      %v2388 = vmax.f32 %v1570, 0.0
      %v2389 = vmax.f32 %v1573, 0.0
      %v2390 = vmax.f32 %v1578, 0.0
      %v2391 = vmax.f32 %v1581, 0.0
      %v2392 = vmax.f32 %v1586, 0.0
      %v2393 = vmax.f32 %v1589, 0.0
      %v2394 = vmax.f32 %v1594, 0.0
      %v2395 = vmax.f32 %v1597, 0.0
      %v2396 = vmax.f32 %v1602, 0.0
      %v2397 = vmax.f32 %v1605, 0.0
      %v2398 = vmax.f32 %v1610, 0.0
      %v2399 = vmax.f32 %v1613, 0.0
      %v2400 = vmax.f32 %v1618, 0.0
      %v2401 = vmax.f32 %v1621, 0.0
      %v2402 = vmax.f32 %v1626, 0.0
      %v2403 = vmax.f32 %v1629, 0.0
      %v2404 = vmax.f32 %v1634, 0.0
      %v2405 = vmax.f32 %v1637, 0.0
      %v2406 = vmax.f32 %v1642, 0.0
      %v2407 = vmax.f32 %v1645, 0.0
      %v2408 = vmax.f32 %v1650, 0.0
      %v2409 = vmax.f32 %v1653, 0.0
      %v2410 = vmax.f32 %v1658, 0.0
      %v2411 = vmax.f32 %v1661, 0.0
      %v2412 = vmax.f32 %v1666, 0.0
      %v2413 = vmax.f32 %v1669, 0.0
      %v2414 = vmax.f32 %v1674, 0.0
      %v2415 = vmax.f32 %v1677, 0.0
      %v2416 = vmax.f32 %v1682, 0.0
      %v2417 = vmax.f32 %v1685, 0.0
      %v2418 = vmax.f32 %v1690, 0.0
      %v2419 = vmax.f32 %v1693, 0.0
      %v2420 = vmax.f32 %v1698, 0.0
      %v2421 = vmax.f32 %v1701, 0.0
      %v2422 = vmax.f32 %v1706, 0.0
      %v2423 = vmax.f32 %v1709, 0.0
      %v2424 = vmax.f32 %v1714, 0.0
      %v2425 = vmax.f32 %v1717, 0.0
      %v2426 = vmax.f32 %v1722, 0.0
      %v2427 = vmax.f32 %v1725, 0.0
      %v2428 = vmax.f32 %v1730, 0.0
      %v2429 = vmax.f32 %v1733, 0.0
      %v2430 = vmax.f32 %v1738, 0.0
      %v2431 = vmax.f32 %v1741, 0.0
      %v2432 = vmax.f32 %v1746, 0.0
      %v2433 = vmax.f32 %v1749, 0.0
      %v2434 = vmax.f32 %v1754, 0.0
      %v2435 = vmax.f32 %v1757, 0.0
      %v2436 = vmax.f32 %v1762, 0.0
      %v2437 = vmax.f32 %v1765, 0.0
      %v2438 = vmax.f32 %v1770, 0.0
      %v2439 = vmax.f32 %v1773, 0.0
      %v2440 = vmax.f32 %v1778, 0.0
      %v2441 = vmax.f32 %v1781, 0.0
      %v2442 = vmax.f32 %v1786, 0.0
      %v2443 = vmax.f32 %v1789, 0.0
      %v2444 = vmax.f32 %v1794, 0.0
      %v2445 = vmax.f32 %v1797, 0.0
      %v2446 = vmax.f32 %v1802, 0.0
      %v2447 = vmax.f32 %v1805, 0.0
      %v2448 = vmax.f32 %v1810, 0.0
      %v2449 = vmax.f32 %v1813, 0.0
      %v2450 = vmax.f32 %v1818, 0.0
      %v2451 = vmax.f32 %v1821, 0.0
      %v2452 = vmax.f32 %v1826, 0.0
      %v2453 = vmax.f32 %v1829, 0.0
      %v2454 = vmax.f32 %v1834, 0.0
      %v2455 = vmax.f32 %v1837, 0.0
      %v2456 = vmax.f32 %v1842, 0.0
      %v2457 = vmax.f32 %v1845, 0.0
      %v2458 = vmax.f32 %v1850, 0.0
      %v2459 = vmax.f32 %v1853, 0.0
      %v2460 = vmax.f32 %v1858, 0.0
      %v2461 = vmax.f32 %v1861, 0.0
      %v2462 = vmax.f32 %v1866, 0.0
      %v2463 = vmax.f32 %v1869, 0.0
      %v2464 = vmax.f32 %v1874, 0.0
      %v2465 = vmax.f32 %v1877, 0.0
      %v2466 = vmax.f32 %v1882, 0.0
      %v2467 = vmax.f32 %v1885, 0.0
      %v2468 = vmax.f32 %v1890, 0.0
      %v2469 = vmax.f32 %v1893, 0.0
      %v2470 = vmax.f32 %v1898, 0.0
      %v2471 = vmax.f32 %v1901, 0.0
      %v2472 = vmax.f32 %v1906, 0.0
      %v2473 = vmax.f32 %v1909, 0.0
      %v2474 = vmax.f32 %v1914, 0.0
      %v2475 = vmax.f32 %v1917, 0.0
      %v2476 = vmax.f32 %v1922, 0.0
      %v2477 = vmax.f32 %v1925, 0.0
      %v2478 = vmax.f32 %v1930, 0.0
      %v2479 = vmax.f32 %v1933, 0.0
      %v2480 = vmax.f32 %v1938, 0.0
      %v2481 = vmax.f32 %v1941, 0.0
      %v2482 = vmax.f32 %v1946, 0.0
      %v2483 = vmax.f32 %v1949, 0.0
      %v2484 = vmax.f32 %v1954, 0.0
      %v2485 = vmax.f32 %v1957, 0.0
      %v2486 = vmax.f32 %v1962, 0.0
      %v2487 = vmax.f32 %v1965, 0.0
      %v2488 = vmax.f32 %v1970, 0.0
      %v2489 = vmax.f32 %v1973, 0.0
      %v2490 = vmax.f32 %v1978, 0.0
      %v2491 = vmax.f32 %v1981, 0.0
      %v2492 = vmax.f32 %v1986, 0.0
      %v2493 = vmax.f32 %v1989, 0.0
      %v2494 = vmax.f32 %v1994, 0.0
      %v2495 = vmax.f32 %v1997, 0.0
      %v2496 = vmax.f32 %v2002, 0.0
      %v2497 = vmax.f32 %v2005, 0.0
      %v2498 = vmax.f32 %v2010, 0.0
      %v2499 = vmax.f32 %v2013, 0.0
      %v2500 = vmax.f32 %v2018, 0.0
      %v2501 = vmax.f32 %v2021, 0.0
      %v2502 = vmax.f32 %v2026, 0.0
      %v2503 = vmax.f32 %v2029, 0.0
      %v2504 = vmax.f32 %v2034, 0.0
      %v2505 = vmax.f32 %v2037, 0.0
      %v2506 = vmax.f32 %v2042, 0.0
      %v2507 = vmax.f32 %v2045, 0.0
      %v2508 = vmax.f32 %v2050, 0.0
      %v2509 = vmax.f32 %v2053, 0.0
      %v2510 = vmax.f32 %v2058, 0.0
      %v2511 = vmax.f32 %v2061, 0.0
      %v2512 = vmax.f32 %v2066, 0.0
      %v2513 = vmax.f32 %v2069, 0.0
      %v2514 = vmax.f32 %v2074, 0.0
      %v2515 = vmax.f32 %v2077, 0.0
      %v2516 = vmax.f32 %v2082, 0.0
      %v2517 = vmax.f32 %v2085, 0.0
      %v2518 = vmax.f32 %v2090, 0.0
      %v2519 = vmax.f32 %v2093, 0.0
      %v2520 = vmax.f32 %v2098, 0.0
      %v2521 = vmax.f32 %v2101, 0.0
      %v2522 = vmax.f32 %v2106, 0.0
      %v2523 = vmax.f32 %v2109, 0.0
      %v2524 = vmax.f32 %v2114, 0.0
      %v2525 = vmax.f32 %v2117, 0.0
      %v2526 = vmax.f32 %v2122, 0.0
      %v2527 = vmax.f32 %v2125, 0.0
      %v2528 = vmax.f32 %v2130, 0.0
      %v2529 = vmax.f32 %v2133, 0.0
      %v2530 = vmax.f32 %v2138, 0.0
      %v2531 = vmax.f32 %v2141, 0.0
      %v2532 = vmax.f32 %v2146, 0.0
      %v2533 = vmax.f32 %v2149, 0.0
      %v2534 = vmax.f32 %v2154, 0.0
      %v2535 = vmax.f32 %v2157, 0.0
      %v2536 = vmax.f32 %v2162, 0.0
      %v2537 = vmax.f32 %v2165, 0.0
      %v2538 = vmax.f32 %v2170, 0.0
      %v2539 = vmax.f32 %v2173, 0.0
      %v2540 = vmax.f32 %v2178, 0.0
      %v2541 = vmax.f32 %v2181, 0.0
      %v2542 = vmax.f32 %v2186, 0.0
      %v2543 = vmax.f32 %v2189, 0.0
      %v2544 = vmax.f32 %v2194, 0.0
      %v2545 = vmax.f32 %v2197, 0.0
      %v2546 = vmax.f32 %v2202, 0.0
      %v2547 = vmax.f32 %v2205, 0.0
      %v2548 = vmax.f32 %v2210, 0.0
      %v2549 = vmax.f32 %v2213, 0.0
      %v2550 = vmax.f32 %v2218, 0.0
      %v2551 = vmax.f32 %v2221, 0.0
      %v2552 = vmax.f32 %v2226, 0.0
      %v2553 = vmax.f32 %v2229, 0.0
      %v2554 = vmax.f32 %v2234, 0.0
      %v2555 = vmax.f32 %v2237, 0.0
      %v2556 = vmax.f32 %v2242, 0.0
      %v2557 = vmax.f32 %v2245, 0.0
      %v2558 = vmax.f32 %v2250, 0.0
      %v2559 = vmax.f32 %v2253, 0.0
      %v2560 = vmax.f32 %v2258, 0.0
      %v2561 = vmax.f32 %v2261, 0.0
      %v2562 = vmax.f32 %v2266, 0.0
      %v2563 = vmax.f32 %v2269, 0.0
      %v2564 = vmax.f32 %v2274, 0.0
      %v2565 = vmax.f32 %v2277, 0.0
      %v2566 = vmax.f32 %v2282, 0.0
      %v2567 = vmax.f32 %v2285, 0.0
      %v2568 = vmax.f32 %v2290, 0.0
      %v2569 = vmax.f32 %v2293, 0.0
      %v2570 = vmax.f32 %v2298, 0.0
      %v2571 = vmax.f32 %v2301, 0.0
      %v2572 = vmax.f32 %v2306, 0.0
      %v2573 = vmax.f32 %v2309, 0.0
      %v2574 = vmax.f32 %v2314, 0.0
      %v2575 = vmax.f32 %v2317, 0.0
      %v2576 = vmax.f32 %v2322, 0.0
      %v2577 = vmax.f32 %v2325, 0.0
      %v2578 = vmax.f32 %v2328, %v2332
      %v2579 = vmax.f32 %v2329, %v2333
      %v2580 = vmax.f32 %v2330, %v2334
      %v2581 = vmax.f32 %v2331, %v2335
      %v2582 = vmax.f32 %v2578, %v2336
      %v2583 = vmax.f32 %v2579, %v2337
      %v2584 = vmax.f32 %v2580, %v2338
      %v2585 = vmax.f32 %v2581, %v2339
      %v2586 = vmax.f32 %v2582, %v2340
      %v2587 = vmax.f32 %v2583, %v2341
      %v2588 = vmax.f32 %v2584, %v2342
      %v2589 = vmax.f32 %v2585, %v2343
      %v2590 = vmax.f32 %v2586, %v2344
      %v2591 = vmax.f32 %v2587, %v2345
      %v2592 = vmax.f32 %v2588, %v2346
      %v2593 = vmax.f32 %v2589, %v2347
      %v2594 = vmax.f32 %v2590, %v2348
      %v2595 = vmax.f32 %v2591, %v2349
      %v2596 = vmax.f32 %v2592, %v2350
      %v2597 = vmax.f32 %v2593, %v2351
      %v2598 = vmax.f32 %v2594, %v2352
      %v2599 = vmax.f32 %v2595, %v2353
      %v2600 = vmax.f32 %v2596, %v2354
      %v2601 = vmax.f32 %v2597, %v2355
      %v2602 = vmax.f32 %v2598, %v2356
      %v2603 = vmax.f32 %v2599, %v2357
      %v2604 = vmax.f32 %v2600, %v2358
      %v2605 = vmax.f32 %v2601, %v2359
      %v2606 = vmax.f32 %v2602, %v2360
      %v2607 = vmax.f32 %v2603, %v2361
      %v2608 = vmax.f32 %v2604, %v2362
      %v2609 = vmax.f32 %v2605, %v2363
      %v2610 = vmax.f32 %v2606, %v2364
      %v2611 = vmax.f32 %v2607, %v2365
      %v2612 = vmax.f32 %v2608, %v2366
      %v2613 = vmax.f32 %v2609, %v2367
      %v2614 = vmax.f32 %v2610, %v2368
      %v2615 = vmax.f32 %v2611, %v2369
      %v2616 = vmax.f32 %v2612, %v2370
      %v2617 = vmax.f32 %v2613, %v2371
      %v2618 = vmax.f32 %v2614, %v2372
      %v2619 = vmax.f32 %v2615, %v2373
      %v2620 = vmax.f32 %v2616, %v2374
      %v2621 = vmax.f32 %v2617, %v2375
      %v2622 = vmax.f32 %v2618, %v2376
      %v2623 = vmax.f32 %v2619, %v2377
      %v2624 = vmax.f32 %v2620, %v2378
      %v2625 = vmax.f32 %v2621, %v2379
      %v2626 = vmax.f32 %v2622, %v2380
      %v2627 = vmax.f32 %v2623, %v2381
      %v2628 = vmax.f32 %v2624, %v2382
      %v2629 = vmax.f32 %v2625, %v2383
      %v2630 = vmax.f32 %v2626, %v2384
      %v2631 = vmax.f32 %v2627, %v2385
      %v2632 = vmax.f32 %v2628, %v2386
      %v2633 = vmax.f32 %v2629, %v2387
      %v2634 = vmax.f32 %v2630, %v2388
      %v2635 = vmax.f32 %v2631, %v2389
      %v2636 = vmax.f32 %v2632, %v2390
      %v2637 = vmax.f32 %v2633, %v2391
      %v2638 = vmax.f32 %v2634, %v2392
      %v2639 = vmax.f32 %v2635, %v2393
      %v2640 = vmax.f32 %v2636, %v2394
      %v2641 = vmax.f32 %v2637, %v2395
      %v2642 = vmax.f32 %v2638, %v2396
      %v2643 = vmax.f32 %v2639, %v2397
      %v2644 = vmax.f32 %v2640, %v2398
      %v2645 = vmax.f32 %v2641, %v2399
      %v2646 = vmax.f32 %v2642, %v2400
      %v2647 = vmax.f32 %v2643, %v2401
      %v2648 = vmax.f32 %v2644, %v2402
      %v2649 = vmax.f32 %v2645, %v2403
      %v2650 = vmax.f32 %v2646, %v2404
      %v2651 = vmax.f32 %v2647, %v2405
      %v2652 = vmax.f32 %v2648, %v2406
      %v2653 = vmax.f32 %v2649, %v2407
      %v2654 = vmax.f32 %v2650, %v2408
      %v2655 = vmax.f32 %v2651, %v2409
      %v2656 = vmax.f32 %v2652, %v2410
      %v2657 = vmax.f32 %v2653, %v2411
      %v2658 = vmax.f32 %v2654, %v2412
      %v2659 = vmax.f32 %v2655, %v2413
      %v2660 = vmax.f32 %v2656, %v2414
      %v2661 = vmax.f32 %v2657, %v2415
      %v2662 = vmax.f32 %v2658, %v2416
      %v2663 = vmax.f32 %v2659, %v2417
      %v2664 = vmax.f32 %v2660, %v2418
      %v2665 = vmax.f32 %v2661, %v2419
      %v2666 = vmax.f32 %v2662, %v2420
      %v2667 = vmax.f32 %v2663, %v2421
      %v2668 = vmax.f32 %v2664, %v2422
      %v2669 = vmax.f32 %v2665, %v2423
      %v2670 = vmax.f32 %v2666, %v2424
      %v2671 = vmax.f32 %v2667, %v2425
      %v2672 = vmax.f32 %v2668, %v2426
      %v2673 = vmax.f32 %v2669, %v2427
      %v2674 = vmax.f32 %v2670, %v2428
      %v2675 = vmax.f32 %v2671, %v2429
      %v2676 = vmax.f32 %v2672, %v2430
      %v2677 = vmax.f32 %v2673, %v2431
      %v2678 = vmax.f32 %v2674, %v2432
      %v2679 = vmax.f32 %v2675, %v2433
      %v2680 = vmax.f32 %v2676, %v2434
      %v2681 = vmax.f32 %v2677, %v2435
      %v2682 = vmax.f32 %v2678, %v2436
      %v2683 = vmax.f32 %v2679, %v2437
      %v2684 = vmax.f32 %v2680, %v2438
      %v2685 = vmax.f32 %v2681, %v2439
      %v2686 = vmax.f32 %v2682, %v2440
      %v2687 = vmax.f32 %v2683, %v2441
      %v2688 = vmax.f32 %v2684, %v2442
      %v2689 = vmax.f32 %v2685, %v2443
      %v2690 = vmax.f32 %v2686, %v2444
      %v2691 = vmax.f32 %v2687, %v2445
      %v2692 = vmax.f32 %v2688, %v2446
      %v2693 = vmax.f32 %v2689, %v2447
      %v2694 = vmax.f32 %v2690, %v2448
      %v2695 = vmax.f32 %v2691, %v2449
      %v2696 = vmax.f32 %v2692, %v2450
      %v2697 = vmax.f32 %v2693, %v2451
      %v2698 = vmax.f32 %v2694, %v2452
      %v2699 = vmax.f32 %v2695, %v2453
      %v2700 = vmax.f32 %v2696, %v2454
      %v2701 = vmax.f32 %v2697, %v2455
      %v2702 = vmax.f32 %v2698, %v2456
      %v2703 = vmax.f32 %v2699, %v2457
      %v2704 = vmax.f32 %v2700, %v2458
      %v2705 = vmax.f32 %v2701, %v2459
      %v2706 = vmax.f32 %v2702, %v2460
      %v2707 = vmax.f32 %v2703, %v2461
      %v2708 = vmax.f32 %v2704, %v2462
      %v2709 = vmax.f32 %v2705, %v2463
      %v2710 = vmax.f32 %v2706, %v2464
      %v2711 = vmax.f32 %v2707, %v2465
      %v2712 = vmax.f32 %v2708, %v2466
      %v2713 = vmax.f32 %v2709, %v2467
      %v2714 = vmax.f32 %v2710, %v2468
      %v2715 = vmax.f32 %v2711, %v2469
      %v2716 = vmax.f32 %v2712, %v2470
      %v2717 = vmax.f32 %v2713, %v2471
      %v2718 = vmax.f32 %v2714, %v2472
      %v2719 = vmax.f32 %v2715, %v2473
      %v2720 = vmax.f32 %v2716, %v2474
      %v2721 = vmax.f32 %v2717, %v2475
      %v2722 = vmax.f32 %v2718, %v2476
      %v2723 = vmax.f32 %v2719, %v2477
      %v2724 = vmax.f32 %v2720, %v2478
      %v2725 = vmax.f32 %v2721, %v2479
      %v2726 = vmax.f32 %v2722, %v2480
      %v2727 = vmax.f32 %v2723, %v2481
      %v2728 = vmax.f32 %v2724, %v2482
      %v2729 = vmax.f32 %v2725, %v2483
      %v2730 = vmax.f32 %v2726, %v2484
      %v2731 = vmax.f32 %v2727, %v2485
      %v2732 = vmax.f32 %v2728, %v2486
      %v2733 = vmax.f32 %v2729, %v2487
      %v2734 = vmax.f32 %v2730, %v2488
      %v2735 = vmax.f32 %v2731, %v2489
      %v2736 = vmax.f32 %v2732, %v2490
      %v2737 = vmax.f32 %v2733, %v2491
      %v2738 = vmax.f32 %v2734, %v2492
      %v2739 = vmax.f32 %v2735, %v2493
      %v2740 = vmax.f32 %v2736, %v2494
      %v2741 = vmax.f32 %v2737, %v2495
      %v2742 = vmax.f32 %v2738, %v2496
      %v2743 = vmax.f32 %v2739, %v2497
      %v2744 = vmax.f32 %v2740, %v2498
      %v2745 = vmax.f32 %v2741, %v2499
      %v2746 = vmax.f32 %v2742, %v2500
      %v2747 = vmax.f32 %v2743, %v2501
      %v2748 = vmax.f32 %v2744, %v2502
      %v2749 = vmax.f32 %v2745, %v2503
      %v2750 = vmax.f32 %v2746, %v2504
      %v2751 = vmax.f32 %v2747, %v2505
      %v2752 = vmax.f32 %v2748, %v2506
      %v2753 = vmax.f32 %v2749, %v2507
      %v2754 = vmax.f32 %v2750, %v2508
      %v2755 = vmax.f32 %v2751, %v2509
      %v2756 = vmax.f32 %v2752, %v2510
      %v2757 = vmax.f32 %v2753, %v2511
      %v2758 = vmax.f32 %v2754, %v2512
      %v2759 = vmax.f32 %v2755, %v2513
      %v2760 = vmax.f32 %v2756, %v2514
      %v2761 = vmax.f32 %v2757, %v2515
      %v2762 = vmax.f32 %v2758, %v2516
      %v2763 = vmax.f32 %v2759, %v2517
      %v2764 = vmax.f32 %v2760, %v2518
      %v2765 = vmax.f32 %v2761, %v2519
      %v2766 = vmax.f32 %v2762, %v2520
      %v2767 = vmax.f32 %v2763, %v2521
      %v2768 = vmax.f32 %v2764, %v2522
      %v2769 = vmax.f32 %v2765, %v2523
      %v2770 = vmax.f32 %v2766, %v2524
      %v2771 = vmax.f32 %v2767, %v2525
      %v2772 = vmax.f32 %v2768, %v2526
      %v2773 = vmax.f32 %v2769, %v2527
      %v2774 = vmax.f32 %v2770, %v2528
      %v2775 = vmax.f32 %v2771, %v2529
      %v2776 = vmax.f32 %v2772, %v2530
      %v2777 = vmax.f32 %v2773, %v2531
      %v2778 = vmax.f32 %v2774, %v2532
      %v2779 = vmax.f32 %v2775, %v2533
      %v2780 = vmax.f32 %v2776, %v2534
      %v2781 = vmax.f32 %v2777, %v2535
      %v2782 = vmax.f32 %v2778, %v2536
      %v2783 = vmax.f32 %v2779, %v2537
      %v2784 = vmax.f32 %v2780, %v2538
      %v2785 = vmax.f32 %v2781, %v2539
      %v2786 = vmax.f32 %v2782, %v2540
      %v2787 = vmax.f32 %v2783, %v2541
      %v2788 = vmax.f32 %v2784, %v2542
      %v2789 = vmax.f32 %v2785, %v2543
      %v2790 = vmax.f32 %v2786, %v2544
      %v2791 = vmax.f32 %v2787, %v2545
      %v2792 = vmax.f32 %v2788, %v2546
      %v2793 = vmax.f32 %v2789, %v2547
      %v2794 = vmax.f32 %v2790, %v2548
      %v2795 = vmax.f32 %v2791, %v2549
      %v2796 = vmax.f32 %v2792, %v2550
      %v2797 = vmax.f32 %v2793, %v2551
      %v2798 = vmax.f32 %v2794, %v2552
      %v2799 = vmax.f32 %v2795, %v2553
      %v2800 = vmax.f32 %v2796, %v2554
      %v2801 = vmax.f32 %v2797, %v2555
      %v2802 = vmax.f32 %v2798, %v2556
      %v2803 = vmax.f32 %v2799, %v2557
      %v2804 = vmax.f32 %v2800, %v2558
      %v2805 = vmax.f32 %v2801, %v2559
      %v2806 = vmax.f32 %v2802, %v2560
      %v2807 = vmax.f32 %v2803, %v2561
      %v2808 = vmax.f32 %v2804, %v2562
      %v2809 = vmax.f32 %v2805, %v2563
      %v2810 = vmax.f32 %v2806, %v2564
      %v2811 = vmax.f32 %v2807, %v2565
      %v2812 = vmax.f32 %v2808, %v2566
      %v2813 = vmax.f32 %v2809, %v2567
      %v2814 = vmax.f32 %v2810, %v2568
      %v2815 = vmax.f32 %v2811, %v2569
      %v2816 = vmax.f32 %v2812, %v2570
      %v2817 = vmax.f32 %v2813, %v2571
      %v2818 = vmax.f32 %v2814, %v2572
      %v2819 = vmax.f32 %v2815, %v2573
      %v2820 = vmax.f32 %v2816, %v2574
      %v2821 = vmax.f32 %v2817, %v2575
      %v2822 = vmax.f32 %v2818, %v2576
      %v2823 = vmax.f32 %v2822, %v2819
      %v2824 = vmax.f32 %v2820, %v2821
      %v2825 = vmax.f32 %v2823, %v2824
      %v2826 = vrot.slane %v2825, 4
      %v2827 = vmax.f32 %v2825, %v2826
      %v2828 = vrot.slane %v2827, 2
      %v2829 = vmax.f32 %v2827, %v2828
      %v2830 = vrot.slane %v2829, 1
      %v2831 = vmax.f32 %v2829, %v2830
      %v2832 = vlaneseq
      %v2833 = vshrl.u32 %v2832, 7
      %vm2834 = vcmp.lt.s32.totalorder %v2833, 6
      %v2835 = vsel %vm2834, 1, 0
      %vm2836 = vcmp.eq.s32.totalorder %v2835, 1
      %v2837 = vsel %vm2836, %v2577, 0.0
      %v2838 = vrot.slane %v2837, 4
      %v2839 = vmax.f32 %v2837, %v2838
      %v2840 = vrot.slane %v2839, 2
      %v2841 = vmax.f32 %v2839, %v2840
      %v2842 = vrot.slane %v2841, 1
      %v2843 = vmax.f32 %v2841, %v2842
      %v2844 = vmax.f32 %v2831, %v2843
      %v2845 = vld [vmem:[%s3] sm:$0x1]
      %v2846 = vmul.f32 %v2844, %v2845
      %vm2847 = vcmask 1040384
      %v2848 = vsel %vm2847, %v2846, 0.0
      %2849 = vadd.xlane.f32.xlu0 %v2848
      %v2850 = vpop.xlane.xlu0 %2849
      %v2851 = vld [vmem:[#allocation2] sm:$0x1]
      %v2852 = vadd.f32 %v2850, %v2851
      %vm2853 = vcmask 0
      %2854 = vst.msk [vmem:[%s222] sm:$0x1] %vm2853, %v2852
      %p2855 = scmp.lt.s32.totalorder %s18, 1
      %s2856 = scalar_select %p2855, %s18, 1
      %s2857 = scalar_lea.vmem %s5, %s2856
      // Predicated region
      $region41: #{token_cnn_forward.1} parent=39 // pred_check
        %p2858 = pneg %p146
      $region42: #{token_cnn_forward.1} parent=39 // pred_check_branch
        %2860 = sbr.rel (%p2858) target = $region44
      $region43: #{token_cnn_forward.1} parent=39 // pred_region
        _
      $region44: #{token_cnn_forward.1} parent=39 // pred_fallthru
        _
    $region40: #{token_cnn_forward.1} parent=5 // pred_fallthru
      _
    %p2861 = scmp.le.s32.totalorder 2, %s13
    // Predicated region
    $region45: #{token_cnn_forward.1} parent=5 // pred_check
      %p2862 = pneg %p2861
    $region46: #{token_cnn_forward.1} parent=5 // pred_check_branch
      %2864 = sbr.rel (%p2862) target = $region48
    $region47: #{token_cnn_forward.1} parent=5 // pred_region
      %s2865 = ssub.s32 %s13, 2
      // Predicated region
      $region49: #{token_cnn_forward.1} parent=47 // pred_check
        %p2866 = pneg %p152
      $region50: #{token_cnn_forward.1} parent=47 // pred_check_branch
        %2868 = sbr.rel (%p2866) target = $region52
      $region51: #{token_cnn_forward.1} parent=47 // pred_region
        %p2869 = scmp.lt.s32.totalorder %s19, 1
        %s2870 = scalar_select %p2869, %s19, 1
        %s2871 = scalar_lea.vmem %s5, %s2870
      $region52: #{token_cnn_forward.1} parent=47 // pred_fallthru
        _
    $region48: #{token_cnn_forward.1} parent=5 // pred_fallthru
      _
  $region6: #{token_cnn_forward.1} parent=0 // loop_footer
    %s17 = sadd.s32 1, %s13
  $region7: #{token_cnn_forward.1} parent=0 // loop_footer_branch
    %12 = sbr.rel target = $region3
  $region8: #{token_cnn_forward.1} parent=0 // loop_exit
    _

</llo_original>
